<compile_context>
chip_gen: v7x
topology: tpu7x:2x2x1
jax: 0.10.0
libtpu: 0.0.40
codegen_flags: <defaults>
</compile_context>

<pallas_src>
import jax
import jax.numpy as jnp
from jax.experimental import pallas as pl
from jax.experimental.pallas import tpu as pltpu

NEG_SLOPE = 0.3   # LeakyReLU slope
BN_EPS = 1e-5     # BatchNorm1d default eps
KSIZE = 3         # conv kernel size (padding=1, stride=1)
POOL = 3          # MaxPool1d(3): kernel=3, stride=3
LANE = 128        # TPU lane width


def _round_up(v, m):
    return (v + m - 1) // m * m


# ------------------------- in-kernel helpers --------------------------------
def _stage_lane_padded(x_ref, xslab):
    """Copy the (rows, Cin) bf16 x block into a (rows, Cin_p) zero-padded
    VMEM slab so downstream matmuls stay lane-dense (K = Cin_p)."""
    cin = x_ref.shape[-1]
    cin_p = xslab.shape[-1]
    if cin == cin_p:
        xslab[...] = x_ref[0]
    else:
        xslab[...] = jnp.zeros_like(xslab)     # pad lanes stay exactly zero
        xslab[:, 0:cin] = x_ref[0]             # masked lane-slice store


def _conv3_acc(src_ref, w_ref, L):
    """k=3, pad=1 conv as three accumulating K-dense MXU dots over shifted
    row windows of an (L+2, C_p) slab (no concat, bf16 operands, f32 acc)."""
    acc = jnp.dot(src_ref[pl.ds(0, L), :], w_ref[0],
                  preferred_element_type=jnp.float32)
    acc = acc + jnp.dot(src_ref[pl.ds(1, L), :], w_ref[1],
                        preferred_element_type=jnp.float32)
    acc = acc + jnp.dot(src_ref[pl.ds(2, L), :], w_ref[2],
                        preferred_element_type=jnp.float32)
    return acc


# --------------------- pass 1: conv1 -> BN partial sums ---------------------
def conv1_stats_kernel(x_ref, w1_ref, stats_ref, xslab):
    # x_ref:     (1, L+2, Cin)       bf16  (L halo-padded, channels UN-padded)
    # w1_ref:    (3, Cin_p, Cout_p)  bf16  (per-tap conv1 weights, zero-padded)
    # stats_ref: (1, 2, Cout_p)      f32   row0 = sum_L h, row1 = sum_L h^2
    # xslab:     (L+2, Cin_p)        bf16  VMEM staging slab
    L = x_ref.shape[1] - 2
    _stage_lane_padded(x_ref, xslab)
    # conv1 bias intentionally omitted: it cancels under the train-mode BN.
    h = _conv3_acc(xslab, w1_ref, L)
    stats_ref[0, 0:1, :] = jnp.sum(h, axis=0, keepdims=True)
    stats_ref[0, 1:2, :] = jnp.sum(h * h, axis=0, keepdims=True)


# --- pass 2: conv1(recompute) -> bn2 -> lrelu -> conv2 (+identity) -> pool ---
def bn_conv2_pool_kernel(x_ref, scale_ref, shift_ref, w1_ref, w2_ref, b2_ref,
                         wd_ref, bd_ref, out_ref, xslab, hpad, o_scr):
    L = x_ref.shape[1] - 2
    Lo = out_ref.shape[1]

    _stage_lane_padded(x_ref, xslab)

    # conv1 recompute (cheaper than round-tripping (N, L, Cout_p) via HBM).
    h = _conv3_acc(xslab, w1_ref, L)

    # bn2 (train-mode stats folded into per-channel scale/shift) + LeakyReLU.
    hn = h * scale_ref[...] + shift_ref[...]
    hn = jnp.where(hn > 0, hn, NEG_SLOPE * hn)

    # Stage into a padded slab: zero ONLY the two halo rows, write interior once.
    zrow = jnp.zeros((1, hpad.shape[1]), hpad.dtype)
    hpad[0:1, :] = zrow
    hpad[L + 1:L + 2, :] = zrow
    hpad[1:L + 1, :] = hn.astype(hpad.dtype)

    # conv2 (k=3, pad=1): three accumulating K=Cout_p dots + bias added once.
    o = _conv3_acc(hpad, w2_ref, L) + b2_ref[...]

    # 1x1 downsample identity path + residual add (one more accumulating dot).
    o = o + jnp.dot(xslab[pl.ds(1, L), :], wd_ref[...],
                    preferred_element_type=jnp.float32)
    o = o + bd_ref[...]

    # MaxPool1d(kernel=3, stride=3): max of three shifted views of the value,
    # one scratch store, ONE stride-3 sublane read (instead of three).
    m = jnp.maximum(jnp.maximum(o[0:L - 2, :], o[1:L - 1, :]), o[2:L, :])
    o_scr[...] = m
    out_ref[0] = o_scr[pl.ds(0, Lo, stride=POOL), :]


# ------------------------------- wrapper ------------------------------------
def _pack_conv3(W, ci_p, co_p):
    """PyTorch (Cout, Cin, 3) conv weight -> (3, ci_p, co_p), tap-major, bf16."""
    co, ci, k = W.shape
    w = jnp.transpose(W, (2, 1, 0))                        # (3, ci, co)
    w = jnp.pad(w, ((0, 0), (0, ci_p - ci), (0, co_p - co)))
    return w.astype(jnp.bfloat16)


def _pad_row(v, c_p):
    return jnp.pad(v.reshape(1, -1),
                   ((0, 0), (0, c_p - v.shape[0]))).astype(jnp.float32)


def _vmem_limit_bytes():
    # Per-generation scoped-VMEM budget: ~3/4 of physical VMEM
    # (~96 MiB on v5e/v6e, ~48 MiB on v7x).  Fall back to default if unknown.
    try:
        cap = int(pltpu.get_tpu_info().vmem_capacity_bytes)
        return cap * 3 // 4 if cap > 0 else None
    except Exception:
        return None


def residual_block_pallas(x, params):
    """x: (N, C_in, L) PyTorch NCL layout.  Returns (N, C_out, L // 3)."""
    W1, b1, gamma, beta, W2, b2, Wd, bd = params
    del b1  # cancels exactly under the train-mode BN that follows conv1
    N, Cin, L = x.shape
    Cout = W1.shape[0]
    Lo = L // POOL
    Cin_p = _round_up(Cin, LANE)
    Cout_p = _round_up(Cout, LANE)

    # Glue (plain JAX): channels-last + 1-row L halo.  Channels are NOT
    # lane-padded in HBM; padding happens inside the kernels (VMEM slab).
    x_nlc = jnp.transpose(x, (0, 2, 1)).astype(jnp.float32)           # (N, L, Cin)
    x_p = jnp.pad(x_nlc, ((0, 0), (1, 1), (0, 0))).astype(jnp.bfloat16)

    w1 = _pack_conv3(W1, Cin_p, Cout_p)                    # (3, Cin_p, Cout_p)
    w2 = _pack_conv3(W2, Cout_p, Cout_p)                   # (3, Cout_p, Cout_p)
    wd = jnp.pad(jnp.transpose(Wd[:, :, 0]),
                 ((0, Cin_p - Cin), (0, Cout_p - Cout))).astype(jnp.bfloat16)
    b2r = _pad_row(b2, Cout_p)
    bdr = _pad_row(bd, Cout_p)

    cparams = pltpu.CompilerParams(
        dimension_semantics=("parallel",),     # batch steps split across TCs (v7x)
        vmem_limit_bytes=_vmem_limit_bytes())

    # ---- pass 1: conv1 + per-batch BN partial sums (no activation to HBM) ----
    flops1 = 2 * N * L * (KSIZE * Cin_p) * Cout_p
    bytes1 = int(x_p.size) * 2 + int(w1.size) * 2 + N * 2 * Cout_p * 4
    stats = pl.pallas_call(
        conv1_stats_kernel,
        out_shape=jax.ShapeDtypeStruct((N, 2, Cout_p), jnp.float32),
        grid=(N,),
        in_specs=[
            pl.BlockSpec((1, L + 2, Cin), lambda n: (n, 0, 0)),
            pl.BlockSpec((KSIZE, Cin_p, Cout_p), lambda n: (0, 0, 0)),
        ],
        out_specs=pl.BlockSpec((1, 2, Cout_p), lambda n: (n, 0, 0)),
        scratch_shapes=[pltpu.VMEM((L + 2, Cin_p), jnp.bfloat16)],
        compiler_params=cparams,
        cost_estimate=pl.CostEstimate(flops=int(flops1), transcendentals=0,
                                      bytes_accessed=int(bytes1)),
    )(x_p, w1)

    # ---- train-mode BN stats -> per-channel scale/shift (tiny O(C) math) ----
    count = jnp.float32(N * L)
    mean = jnp.sum(stats[:, 0, :], axis=0) / count
    var = jnp.maximum(jnp.sum(stats[:, 1, :], axis=0) / count - mean * mean, 0.0)
    g_p = jnp.pad(gamma, (0, Cout_p - Cout)).astype(jnp.float32)   # pad -> 0
    be_p = jnp.pad(beta, (0, Cout_p - Cout)).astype(jnp.float32)   # pad -> 0
    scale = (g_p * jax.lax.rsqrt(var + BN_EPS)).reshape(1, Cout_p)
    shift = (be_p - mean * scale[0]).reshape(1, Cout_p)

    # ---- pass 2: conv1(recompute) + bn2 + lrelu + conv2 + identity + pool ----
    flops2 = 2 * N * L * (KSIZE * Cin_p + KSIZE * Cout_p + Cin_p) * Cout_p
    bytes2 = (int(x_p.size) * 2 + int(w1.size) * 2 + int(w2.size) * 2
              + int(wd.size) * 2 + N * Lo * Cout_p * 4 + 4 * Cout_p * 4)
    out_p = pl.pallas_call(
        bn_conv2_pool_kernel,
        out_shape=jax.ShapeDtypeStruct((N, Lo, Cout_p), jnp.float32),
        grid=(N,),
        in_specs=[
            pl.BlockSpec((1, L + 2, Cin), lambda n: (n, 0, 0)),       # x (halo)
            pl.BlockSpec((1, Cout_p), lambda n: (0, 0)),              # bn scale
            pl.BlockSpec((1, Cout_p), lambda n: (0, 0)),              # bn shift
            pl.BlockSpec((KSIZE, Cin_p, Cout_p), lambda n: (0, 0, 0)),   # w1
            pl.BlockSpec((KSIZE, Cout_p, Cout_p), lambda n: (0, 0, 0)),  # w2
            pl.BlockSpec((1, Cout_p), lambda n: (0, 0)),              # b2
            pl.BlockSpec((Cin_p, Cout_p), lambda n: (0, 0)),          # wd (1x1)
            pl.BlockSpec((1, Cout_p), lambda n: (0, 0)),              # bd
        ],
        out_specs=pl.BlockSpec((1, Lo, Cout_p), lambda n: (n, 0, 0)),
        scratch_shapes=[
            pltpu.VMEM((L + 2, Cin_p), jnp.bfloat16),   # x staging slab
            pltpu.VMEM((L + 2, Cout_p), jnp.bfloat16),  # padded bn/lrelu slab
            pltpu.VMEM((L - 2, Cout_p), jnp.float32),   # pre-pool (max'd) buffer
        ],
        compiler_params=cparams,
        cost_estimate=pl.CostEstimate(flops=int(flops2), transcendentals=0,
                                      bytes_accessed=int(bytes2)),
    )(x_p, scale, shift, w1, w2, b2r, wd, bdr)

    return jnp.transpose(out_p[:, :, :Cout], (0, 2, 1))              # (N, Cout, Lo)


# ------------------------------ reference -----------------------------------
def reference(x, params):
    """Pure-JAX f32 reference mirroring the PyTorch forward (train-mode BN)."""
    W1, b1, gamma, beta, W2, b2, Wd, bd = params

    def conv1d(x_, W, b, pad):
        y = jax.lax.conv_general_dilated(
            x_, W, window_strides=(1,), padding=[(pad, pad)],
            dimension_numbers=('NCH', 'OIH', 'NCH'),
            precision=jax.lax.Precision.HIGHEST)
        return y + b[None, :, None]

    h = conv1d(x, W1, b1, 1)                               # conv1(x)
    mean = h.mean(axis=(0, 2), keepdims=True)
    var = ((h - mean) ** 2).mean(axis=(0, 2), keepdims=True)
    h = (h - mean) / jnp.sqrt(var + BN_EPS) * gamma[None, :, None] + beta[None, :, None]
    h = jnp.where(h > 0, h, NEG_SLOPE * h)
    o = conv1d(h, W2, b2, 1)
    ident = conv1d(x, Wd, bd, 0)                           # downsample (1x1)
    o = o + ident
    N_, C_, L_ = o.shape
    Lo = L_ // POOL
    return o[:, :, :Lo * POOL].reshape(N_, C_, Lo, POOL).max(axis=-1)


if __name__ == "__main__":
    # nb_filts = [4, 8]  (C_in != C_out -> downsample path is active)
    N, Cin, Cout, L = 2, 4, 8, 24
    key = jax.random.PRNGKey(0)
    ks = jax.random.split(key, 9)

    x = jax.random.normal(ks[0], (N, Cin, L), jnp.float32)
    W1 = 0.3 * jax.random.normal(ks[1], (Cout, Cin, KSIZE), jnp.float32)
    b1 = 0.1 * jax.random.normal(ks[2], (Cout,), jnp.float32)
    gamma = 1.0 + 0.1 * jax.random.normal(ks[3], (Cout,), jnp.float32)
    beta = 0.1 * jax.random.normal(ks[4], (Cout,), jnp.float32)
    W2 = 0.3 * jax.random.normal(ks[5], (Cout, Cout, KSIZE), jnp.float32)
    b2 = 0.1 * jax.random.normal(ks[6], (Cout,), jnp.float32)
    Wd = 0.3 * jax.random.normal(ks[7], (Cout, Cin, 1), jnp.float32)
    bd = 0.1 * jax.random.normal(ks[8], (Cout,), jnp.float32)
    params = (W1, b1, gamma, beta, W2, b2, Wd, bd)

    fn = jax.jit(residual_block_pallas)
    out = jax.block_until_ready(fn(x, params))

    ref = reference(x, params)
    assert out.shape == (N, Cout, L // POOL), out.shape
    # bf16-operand MXU matmuls (f32 accumulate) vs f32 HIGHEST reference: ~1e-2 class.
    if not jnp.allclose(out, ref, atol=3e-2, rtol=3e-2):
        raise AssertionError(
            f"mismatch: max abs err = {jnp.max(jnp.abs(out - ref))}")
    print("KERNEL_OK")
</pallas_src>

<mosaic_0001>
module attributes {stable_mosaic.version = 11 : i64} {
  func.func @conv1_stats_kernel(%arg0: i32, %arg1: memref<1x26x4xbf16, #tpu.memory_space<vmem>>, %arg2: memref<3x128x128xbf16, #tpu.memory_space<vmem>>, %arg3: memref<1x2x128xf32, #tpu.memory_space<vmem>>, %arg4: memref<26x128xbf16, #tpu.memory_space<vmem>>) attributes {dimension_semantics = [#tpu.dimension_semantics<parallel>], iteration_bounds = array<i64: 2>, scalar_prefetch = 0 : i64, scratch_operands = 1 : i64, tpu.core_type = #tpu.core_type<tc>, window_params = [{transform_indices = @transform_0, window_bounds = array<i64: 1, 26, 4>}, {pipeline_mode = #tpu.pipeline_mode<synchronous>, transform_indices = @transform_1, window_bounds = array<i64: 3, 128, 128>}, {transform_indices = @transform_2, window_bounds = array<i64: 1, 2, 128>}]} {
    %cst = arith.constant 0.000000e+00 : bf16
    %0 = vector.broadcast %cst : bf16 to vector<26x128xbf16>
    %c0 = arith.constant 0 : index
    %c0_0 = arith.constant 0 : index
    %1 = vector.load %arg4[%c0, %c0_0] : memref<26x128xbf16, #tpu.memory_space<vmem>>, vector<26x128xbf16>
    tpu.vector_store %arg4[%c0, %c0_0], %0 {strides = array<i32>} : memref<26x128xbf16, #tpu.memory_space<vmem>>, vector<26x128xbf16>,
    %c0_1 = arith.constant 0 : index
    %c0_2 = arith.constant 0 : index
    %c0_3 = arith.constant 0 : index
    %2 = vector.load %arg1[%c0_1, %c0_2, %c0_3] : memref<1x26x4xbf16, #tpu.memory_space<vmem>>, vector<1x26x4xbf16>
    %3 = vector.shape_cast %2 : vector<1x26x4xbf16> to vector<26x4xbf16>
    %c0_4 = arith.constant 0 : index
    %c0_5 = arith.constant 0 : index
    %4 = vector.load %arg4[%c0_4, %c0_5] : memref<26x128xbf16, #tpu.memory_space<vmem>>, vector<26x4xbf16>
    tpu.vector_store %arg4[%c0_4, %c0_5], %3 {strides = array<i32>} : memref<26x128xbf16, #tpu.memory_space<vmem>>, vector<26x4xbf16>,
    %c0_6 = arith.constant 0 : index
    %c0_7 = arith.constant 0 : index
    %5 = vector.load %arg4[%c0_6, %c0_7] : memref<26x128xbf16, #tpu.memory_space<vmem>>, vector<24x128xbf16>
    %c0_8 = arith.constant 0 : index
    %c0_9 = arith.constant 0 : index
    %c0_10 = arith.constant 0 : index
    %6 = vector.load %arg2[%c0_8, %c0_9, %c0_10] : memref<3x128x128xbf16, #tpu.memory_space<vmem>>, vector<1x128x128xbf16>
    %7 = vector.shape_cast %6 : vector<1x128x128xbf16> to vector<128x128xbf16>
    %cst_11 = arith.constant dense<0.000000e+00> : vector<24x128xf32>
    %8 = tpu.matmul %5, %7, %cst_11 {dimension_numbers = #tpu.dot_dimension_numbers<[1], [0], [0], [1], [0, 0, 1, 1], [], []>} : vector<24x128xbf16>, vector<128x128xbf16>, vector<24x128xf32> -> vector<24x128xf32>
    %c1 = arith.constant 1 : index
    %c0_12 = arith.constant 0 : index
    %9 = vector.load %arg4[%c1, %c0_12] : memref<26x128xbf16, #tpu.memory_space<vmem>>, vector<24x128xbf16>
    %c1_13 = arith.constant 1 : index
    %c0_14 = arith.constant 0 : index
    %c0_15 = arith.constant 0 : index
    %10 = vector.load %arg2[%c1_13, %c0_14, %c0_15] : memref<3x128x128xbf16, #tpu.memory_space<vmem>>, vector<1x128x128xbf16>
    %11 = vector.shape_cast %10 : vector<1x128x128xbf16> to vector<128x128xbf16>
    %cst_16 = arith.constant dense<0.000000e+00> : vector<24x128xf32>
    %12 = tpu.matmul %9, %11, %cst_16 {dimension_numbers = #tpu.dot_dimension_numbers<[1], [0], [0], [1], [0, 0, 1, 1], [], []>} : vector<24x128xbf16>, vector<128x128xbf16>, vector<24x128xf32> -> vector<24x128xf32>
    %13 = arith.addf %8, %12 : vector<24x128xf32>
    %c2 = arith.constant 2 : index
    %c0_17 = arith.constant 0 : index
    %14 = vector.load %arg4[%c2, %c0_17] : memref<26x128xbf16, #tpu.memory_space<vmem>>, vector<24x128xbf16>
    %c2_18 = arith.constant 2 : index
    %c0_19 = arith.constant 0 : index
    %c0_20 = arith.constant 0 : index
    %15 = vector.load %arg2[%c2_18, %c0_19, %c0_20] : memref<3x128x128xbf16, #tpu.memory_space<vmem>>, vector<1x128x128xbf16>
    %16 = vector.shape_cast %15 : vector<1x128x128xbf16> to vector<128x128xbf16>
    %cst_21 = arith.constant dense<0.000000e+00> : vector<24x128xf32>
    %17 = tpu.matmul %14, %16, %cst_21 {dimension_numbers = #tpu.dot_dimension_numbers<[1], [0], [0], [1], [0, 0, 1, 1], [], []>} : vector<24x128xbf16>, vector<128x128xbf16>, vector<24x128xf32> -> vector<24x128xf32>
    %18 = arith.addf %13, %17 : vector<24x128xf32>
    %cst_22 = arith.constant dense<0.000000e+00> : vector<128xf32>
    %19 = vector.multi_reduction <add>, %18, %cst_22 [0] : vector<24x128xf32> to vector<128xf32>
    %20 = vector.shape_cast %19 : vector<128xf32> to vector<1x128xf32>
    %c0_23 = arith.constant 0 : index
    %c0_24 = arith.constant 0 : index
    %c0_25 = arith.constant 0 : index
    %21 = vector.load %arg3[%c0_23, %c0_24, %c0_25] : memref<1x2x128xf32, #tpu.memory_space<vmem>>, vector<1x1x128xf32>
    %22 = vector.shape_cast %21 : vector<1x1x128xf32> to vector<1x128xf32>
    %23 = vector.shape_cast %20 : vector<1x128xf32> to vector<1x1x128xf32>
    tpu.vector_store %arg3[%c0_23, %c0_24, %c0_25], %23 {strides = array<i32>} : memref<1x2x128xf32, #tpu.memory_space<vmem>>, vector<1x1x128xf32>,
    %24 = arith.mulf %18, %18 : vector<24x128xf32>
    %cst_26 = arith.constant dense<0.000000e+00> : vector<128xf32>
    %25 = vector.multi_reduction <add>, %24, %cst_26 [0] : vector<24x128xf32> to vector<128xf32>
    %26 = vector.shape_cast %25 : vector<128xf32> to vector<1x128xf32>
    %c0_27 = arith.constant 0 : index
    %c1_28 = arith.constant 1 : index
    %c0_29 = arith.constant 0 : index
    %27 = vector.load %arg3[%c0_27, %c1_28, %c0_29] : memref<1x2x128xf32, #tpu.memory_space<vmem>>, vector<1x1x128xf32>
    %28 = vector.shape_cast %27 : vector<1x1x128xf32> to vector<1x128xf32>
    %29 = vector.shape_cast %26 : vector<1x128xf32> to vector<1x1x128xf32>
    tpu.vector_store %arg3[%c0_27, %c1_28, %c0_29], %29 {strides = array<i32>} : memref<1x2x128xf32, #tpu.memory_space<vmem>>, vector<1x1x128xf32>,
    return
  }
  func.func @transform_0(%arg0: i32) -> (i32, i32, i32) {
    %c0_i32 = arith.constant 0 : i32
    %c0_i32_0 = arith.constant 0 : i32
    %c0_i32_1 = arith.constant 0 : i32
    return %arg0, %c0_i32, %c0_i32_0 : i32, i32, i32
  }
  func.func @transform_1(%arg0: i32) -> (i32, i32, i32) {
    %c0_i32 = arith.constant 0 : i32
    %c0_i32_0 = arith.constant 0 : i32
    %c0_i32_1 = arith.constant 0 : i32
    %c0_i32_2 = arith.constant 0 : i32
    return %c0_i32, %c0_i32_0, %c0_i32_1 : i32, i32, i32
  }
  func.func @transform_2(%arg0: i32) -> (i32, i32, i32) {
    %c0_i32 = arith.constant 0 : i32
    %c0_i32_0 = arith.constant 0 : i32
    %c0_i32_1 = arith.constant 0 : i32
    return %arg0, %c0_i32, %c0_i32_0 : i32, i32, i32
  }
}

module attributes {stable_mosaic.version = 11 : i64} {
  func.func @bn_conv2_pool_kernel(%arg0: i32, %arg1: memref<1x26x4xbf16, #tpu.memory_space<vmem>>, %arg2: memref<1x128xf32, #tpu.memory_space<vmem>>, %arg3: memref<1x128xf32, #tpu.memory_space<vmem>>, %arg4: memref<3x128x128xbf16, #tpu.memory_space<vmem>>, %arg5: memref<3x128x128xbf16, #tpu.memory_space<vmem>>, %arg6: memref<1x128xf32, #tpu.memory_space<vmem>>, %arg7: memref<128x128xbf16, #tpu.memory_space<vmem>>, %arg8: memref<1x128xf32, #tpu.memory_space<vmem>>, %arg9: memref<1x8x128xf32, #tpu.memory_space<vmem>>, %arg10: memref<26x128xbf16, #tpu.memory_space<vmem>>, %arg11: memref<26x128xbf16, #tpu.memory_space<vmem>>, %arg12: memref<22x128xf32, #tpu.memory_space<vmem>>) attributes {dimension_semantics = [#tpu.dimension_semantics<parallel>], iteration_bounds = array<i64: 2>, scalar_prefetch = 0 : i64, scratch_operands = 3 : i64, tpu.core_type = #tpu.core_type<tc>, window_params = [{transform_indices = @transform_0, window_bounds = array<i64: 1, 26, 4>}, {pipeline_mode = #tpu.pipeline_mode<synchronous>, transform_indices = @transform_1, window_bounds = array<i64: 1, 128>}, {pipeline_mode = #tpu.pipeline_mode<synchronous>, transform_indices = @transform_2, window_bounds = array<i64: 1, 128>}, {pipeline_mode = #tpu.pipeline_mode<synchronous>, transform_indices = @transform_3, window_bounds = array<i64: 3, 128, 128>}, {pipeline_mode = #tpu.pipeline_mode<synchronous>, transform_indices = @transform_4, window_bounds = array<i64: 3, 128, 128>}, {pipeline_mode = #tpu.pipeline_mode<synchronous>, transform_indices = @transform_5, window_bounds = array<i64: 1, 128>}, {pipeline_mode = #tpu.pipeline_mode<synchronous>, transform_indices = @transform_6, window_bounds = array<i64: 128, 128>}, {pipeline_mode = #tpu.pipeline_mode<synchronous>, transform_indices = @transform_7, window_bounds = array<i64: 1, 128>}, {transform_indices = @transform_8, window_bounds = array<i64: 1, 8, 128>}]} {
    %cst = arith.constant 0.000000e+00 : bf16
    %0 = vector.broadcast %cst : bf16 to vector<26x128xbf16>
    %c0 = arith.constant 0 : index
    %c0_0 = arith.constant 0 : index
    %1 = vector.load %arg10[%c0, %c0_0] : memref<26x128xbf16, #tpu.memory_space<vmem>>, vector<26x128xbf16>
    tpu.vector_store %arg10[%c0, %c0_0], %0 {strides = array<i32>} : memref<26x128xbf16, #tpu.memory_space<vmem>>, vector<26x128xbf16>,
    %c0_1 = arith.constant 0 : index
    %c0_2 = arith.constant 0 : index
    %c0_3 = arith.constant 0 : index
    %2 = vector.load %arg1[%c0_1, %c0_2, %c0_3] : memref<1x26x4xbf16, #tpu.memory_space<vmem>>, vector<1x26x4xbf16>
    %3 = vector.shape_cast %2 : vector<1x26x4xbf16> to vector<26x4xbf16>
    %c0_4 = arith.constant 0 : index
    %c0_5 = arith.constant 0 : index
    %4 = vector.load %arg10[%c0_4, %c0_5] : memref<26x128xbf16, #tpu.memory_space<vmem>>, vector<26x4xbf16>
    tpu.vector_store %arg10[%c0_4, %c0_5], %3 {strides = array<i32>} : memref<26x128xbf16, #tpu.memory_space<vmem>>, vector<26x4xbf16>,
    %c0_6 = arith.constant 0 : index
    %c0_7 = arith.constant 0 : index
    %5 = vector.load %arg10[%c0_6, %c0_7] : memref<26x128xbf16, #tpu.memory_space<vmem>>, vector<24x128xbf16>
    %c0_8 = arith.constant 0 : index
    %c0_9 = arith.constant 0 : index
    %c0_10 = arith.constant 0 : index
    %6 = vector.load %arg4[%c0_8, %c0_9, %c0_10] : memref<3x128x128xbf16, #tpu.memory_space<vmem>>, vector<1x128x128xbf16>
    %7 = vector.shape_cast %6 : vector<1x128x128xbf16> to vector<128x128xbf16>
    %cst_11 = arith.constant dense<0.000000e+00> : vector<24x128xf32>
    %8 = tpu.matmul %5, %7, %cst_11 {dimension_numbers = #tpu.dot_dimension_numbers<[1], [0], [0], [1], [0, 0, 1, 1], [], []>} : vector<24x128xbf16>, vector<128x128xbf16>, vector<24x128xf32> -> vector<24x128xf32>
    %c1 = arith.constant 1 : index
    %c0_12 = arith.constant 0 : index
    %9 = vector.load %arg10[%c1, %c0_12] : memref<26x128xbf16, #tpu.memory_space<vmem>>, vector<24x128xbf16>
    %c1_13 = arith.constant 1 : index
    %c0_14 = arith.constant 0 : index
    %c0_15 = arith.constant 0 : index
    %10 = vector.load %arg4[%c1_13, %c0_14, %c0_15] : memref<3x128x128xbf16, #tpu.memory_space<vmem>>, vector<1x128x128xbf16>
    %11 = vector.shape_cast %10 : vector<1x128x128xbf16> to vector<128x128xbf16>
    %cst_16 = arith.constant dense<0.000000e+00> : vector<24x128xf32>
    %12 = tpu.matmul %9, %11, %cst_16 {dimension_numbers = #tpu.dot_dimension_numbers<[1], [0], [0], [1], [0, 0, 1, 1], [], []>} : vector<24x128xbf16>, vector<128x128xbf16>, vector<24x128xf32> -> vector<24x128xf32>
    %13 = arith.addf %8, %12 : vector<24x128xf32>
    %c2 = arith.constant 2 : index
    %c0_17 = arith.constant 0 : index
    %14 = vector.load %arg10[%c2, %c0_17] : memref<26x128xbf16, #tpu.memory_space<vmem>>, vector<24x128xbf16>
    %c2_18 = arith.constant 2 : index
    %c0_19 = arith.constant 0 : index
    %c0_20 = arith.constant 0 : index
    %15 = vector.load %arg4[%c2_18, %c0_19, %c0_20] : memref<3x128x128xbf16, #tpu.memory_space<vmem>>, vector<1x128x128xbf16>
    %16 = vector.shape_cast %15 : vector<1x128x128xbf16> to vector<128x128xbf16>
    %cst_21 = arith.constant dense<0.000000e+00> : vector<24x128xf32>
    %17 = tpu.matmul %14, %16, %cst_21 {dimension_numbers = #tpu.dot_dimension_numbers<[1], [0], [0], [1], [0, 0, 1, 1], [], []>} : vector<24x128xbf16>, vector<128x128xbf16>, vector<24x128xf32> -> vector<24x128xf32>
    %18 = arith.addf %13, %17 : vector<24x128xf32>
    %c0_22 = arith.constant 0 : index
    %c0_23 = arith.constant 0 : index
    %19 = vector.load %arg2[%c0_22, %c0_23] : memref<1x128xf32, #tpu.memory_space<vmem>>, vector<1x128xf32>
    %20 = vector.broadcast %19 : vector<1x128xf32> to vector<24x128xf32>
    %21 = arith.mulf %18, %20 : vector<24x128xf32>
    %c0_24 = arith.constant 0 : index
    %c0_25 = arith.constant 0 : index
    %22 = vector.load %arg3[%c0_24, %c0_25] : memref<1x128xf32, #tpu.memory_space<vmem>>, vector<1x128xf32>
    %23 = vector.broadcast %22 : vector<1x128xf32> to vector<24x128xf32>
    %24 = arith.addf %21, %23 : vector<24x128xf32>
    %cst_26 = arith.constant 0.000000e+00 : f32
    %25 = vector.broadcast %cst_26 : f32 to vector<24x128xf32>
    %26 = arith.cmpf ogt, %24, %25 : vector<24x128xf32>
    %cst_27 = arith.constant 3.000000e-01 : f32
    %27 = vector.broadcast %cst_27 : f32 to vector<24x128xf32>
    %28 = arith.mulf %27, %24 : vector<24x128xf32>
    %29 = arith.select %26, %24, %28 : vector<24x128xi1>, vector<24x128xf32>
    %cst_28 = arith.constant 0.000000e+00 : bf16
    %30 = vector.broadcast %cst_28 : bf16 to vector<1x128xbf16>
    %c0_29 = arith.constant 0 : index
    %c0_30 = arith.constant 0 : index
    %31 = vector.load %arg11[%c0_29, %c0_30] : memref<26x128xbf16, #tpu.memory_space<vmem>>, vector<1x128xbf16>
    tpu.vector_store %arg11[%c0_29, %c0_30], %30 {strides = array<i32>} : memref<26x128xbf16, #tpu.memory_space<vmem>>, vector<1x128xbf16>,
    %c25 = arith.constant 25 : index
    %c0_31 = arith.constant 0 : index
    %32 = vector.load %arg11[%c25, %c0_31] : memref<26x128xbf16, #tpu.memory_space<vmem>>, vector<1x128xbf16>
    tpu.vector_store %arg11[%c25, %c0_31], %30 {strides = array<i32>} : memref<26x128xbf16, #tpu.memory_space<vmem>>, vector<1x128xbf16>,
    %33 = arith.truncf %29 : vector<24x128xf32> to vector<24x128xbf16>
    %c1_32 = arith.constant 1 : index
    %c0_33 = arith.constant 0 : index
    %34 = vector.load %arg11[%c1_32, %c0_33] : memref<26x128xbf16, #tpu.memory_space<vmem>>, vector<24x128xbf16>
    tpu.vector_store %arg11[%c1_32, %c0_33], %33 {strides = array<i32>} : memref<26x128xbf16, #tpu.memory_space<vmem>>, vector<24x128xbf16>,
    %c0_34 = arith.constant 0 : index
    %c0_35 = arith.constant 0 : index
    %35 = vector.load %arg11[%c0_34, %c0_35] : memref<26x128xbf16, #tpu.memory_space<vmem>>, vector<24x128xbf16>
    %c0_36 = arith.constant 0 : index
    %c0_37 = arith.constant 0 : index
    %c0_38 = arith.constant 0 : index
    %36 = vector.load %arg5[%c0_36, %c0_37, %c0_38] : memref<3x128x128xbf16, #tpu.memory_space<vmem>>, vector<1x128x128xbf16>
    %37 = vector.shape_cast %36 : vector<1x128x128xbf16> to vector<128x128xbf16>
    %cst_39 = arith.constant dense<0.000000e+00> : vector<24x128xf32>
    %38 = tpu.matmul %35, %37, %cst_39 {dimension_numbers = #tpu.dot_dimension_numbers<[1], [0], [0], [1], [0, 0, 1, 1], [], []>} : vector<24x128xbf16>, vector<128x128xbf16>, vector<24x128xf32> -> vector<24x128xf32>
    %c1_40 = arith.constant 1 : index
    %c0_41 = arith.constant 0 : index
    %39 = vector.load %arg11[%c1_40, %c0_41] : memref<26x128xbf16, #tpu.memory_space<vmem>>, vector<24x128xbf16>
    %c1_42 = arith.constant 1 : index
    %c0_43 = arith.constant 0 : index
    %c0_44 = arith.constant 0 : index
    %40 = vector.load %arg5[%c1_42, %c0_43, %c0_44] : memref<3x128x128xbf16, #tpu.memory_space<vmem>>, vector<1x128x128xbf16>
    %41 = vector.shape_cast %40 : vector<1x128x128xbf16> to vector<128x128xbf16>
    %cst_45 = arith.constant dense<0.000000e+00> : vector<24x128xf32>
    %42 = tpu.matmul %39, %41, %cst_45 {dimension_numbers = #tpu.dot_dimension_numbers<[1], [0], [0], [1], [0, 0, 1, 1], [], []>} : vector<24x128xbf16>, vector<128x128xbf16>, vector<24x128xf32> -> vector<24x128xf32>
    %43 = arith.addf %38, %42 : vector<24x128xf32>
    %c2_46 = arith.constant 2 : index
    %c0_47 = arith.constant 0 : index
    %44 = vector.load %arg11[%c2_46, %c0_47] : memref<26x128xbf16, #tpu.memory_space<vmem>>, vector<24x128xbf16>
    %c2_48 = arith.constant 2 : index
    %c0_49 = arith.constant 0 : index
    %c0_50 = arith.constant 0 : index
    %45 = vector.load %arg5[%c2_48, %c0_49, %c0_50] : memref<3x128x128xbf16, #tpu.memory_space<vmem>>, vector<1x128x128xbf16>
    %46 = vector.shape_cast %45 : vector<1x128x128xbf16> to vector<128x128xbf16>
    %cst_51 = arith.constant dense<0.000000e+00> : vector<24x128xf32>
    %47 = tpu.matmul %44, %46, %cst_51 {dimension_numbers = #tpu.dot_dimension_numbers<[1], [0], [0], [1], [0, 0, 1, 1], [], []>} : vector<24x128xbf16>, vector<128x128xbf16>, vector<24x128xf32> -> vector<24x128xf32>
    %48 = arith.addf %43, %47 : vector<24x128xf32>
    %c0_52 = arith.constant 0 : index
    %c0_53 = arith.constant 0 : index
    %49 = vector.load %arg6[%c0_52, %c0_53] : memref<1x128xf32, #tpu.memory_space<vmem>>, vector<1x128xf32>
    %50 = vector.broadcast %49 : vector<1x128xf32> to vector<24x128xf32>
    %51 = arith.addf %48, %50 : vector<24x128xf32>
    %c1_54 = arith.constant 1 : index
    %c0_55 = arith.constant 0 : index
    %52 = vector.load %arg10[%c1_54, %c0_55] : memref<26x128xbf16, #tpu.memory_space<vmem>>, vector<24x128xbf16>
    %c0_56 = arith.constant 0 : index
    %c0_57 = arith.constant 0 : index
    %53 = vector.load %arg7[%c0_56, %c0_57] : memref<128x128xbf16, #tpu.memory_space<vmem>>, vector<128x128xbf16>
    %cst_58 = arith.constant dense<0.000000e+00> : vector<24x128xf32>
    %54 = tpu.matmul %52, %53, %cst_58 {dimension_numbers = #tpu.dot_dimension_numbers<[1], [0], [0], [1], [0, 0, 1, 1], [], []>} : vector<24x128xbf16>, vector<128x128xbf16>, vector<24x128xf32> -> vector<24x128xf32>
    %55 = arith.addf %51, %54 : vector<24x128xf32>
    %c0_59 = arith.constant 0 : index
    %c0_60 = arith.constant 0 : index
    %56 = vector.load %arg8[%c0_59, %c0_60] : memref<1x128xf32, #tpu.memory_space<vmem>>, vector<1x128xf32>
    %57 = vector.broadcast %56 : vector<1x128xf32> to vector<24x128xf32>
    %58 = arith.addf %55, %57 : vector<24x128xf32>
    %59 = vector.extract_strided_slice %58 {offsets = [0, 0], sizes = [22, 128], strides = [1, 1]} : vector<24x128xf32> to vector<22x128xf32>
    %60 = vector.extract_strided_slice %58 {offsets = [1, 0], sizes = [22, 128], strides = [1, 1]} : vector<24x128xf32> to vector<22x128xf32>
    %61 = arith.maximumf %59, %60 : vector<22x128xf32>
    %62 = vector.extract_strided_slice %58 {offsets = [2, 0], sizes = [22, 128], strides = [1, 1]} : vector<24x128xf32> to vector<22x128xf32>
    %63 = arith.maximumf %61, %62 : vector<22x128xf32>
    %c0_61 = arith.constant 0 : index
    %c0_62 = arith.constant 0 : index
    %64 = vector.load %arg12[%c0_61, %c0_62] : memref<22x128xf32, #tpu.memory_space<vmem>>, vector<22x128xf32>
    tpu.vector_store %arg12[%c0_61, %c0_62], %63 {strides = array<i32>} : memref<22x128xf32, #tpu.memory_space<vmem>>, vector<22x128xf32>,
    %c0_63 = arith.constant 0 : index
    %c0_64 = arith.constant 0 : index
    %65 = tpu.strided_load %arg12[%c0_63, %c0_64] {strides = array<i32: 3, 1>} : memref<22x128xf32, #tpu.memory_space<vmem>>, vector<8x128xf32>
    %c0_65 = arith.constant 0 : index
    %c0_66 = arith.constant 0 : index
    %c0_67 = arith.constant 0 : index
    %66 = vector.load %arg9[%c0_65, %c0_66, %c0_67] : memref<1x8x128xf32, #tpu.memory_space<vmem>>, vector<1x8x128xf32>
    %67 = vector.shape_cast %66 : vector<1x8x128xf32> to vector<8x128xf32>
    %68 = vector.shape_cast %65 : vector<8x128xf32> to vector<1x8x128xf32>
    tpu.vector_store %arg9[%c0_65, %c0_66, %c0_67], %68 {strides = array<i32>} : memref<1x8x128xf32, #tpu.memory_space<vmem>>, vector<1x8x128xf32>,
    return
  }
  func.func @transform_0(%arg0: i32) -> (i32, i32, i32) {
    %c0_i32 = arith.constant 0 : i32
    %c0_i32_0 = arith.constant 0 : i32
    %c0_i32_1 = arith.constant 0 : i32
    return %arg0, %c0_i32, %c0_i32_0 : i32, i32, i32
  }
  func.func @transform_1(%arg0: i32) -> (i32, i32) {
    %c0_i32 = arith.constant 0 : i32
    %c0_i32_0 = arith.constant 0 : i32
    %c0_i32_1 = arith.constant 0 : i32
    return %c0_i32, %c0_i32_0 : i32, i32
  }
  func.func @transform_2(%arg0: i32) -> (i32, i32) {
    %c0_i32 = arith.constant 0 : i32
    %c0_i32_0 = arith.constant 0 : i32
    %c0_i32_1 = arith.constant 0 : i32
    return %c0_i32, %c0_i32_0 : i32, i32
  }
  func.func @transform_3(%arg0: i32) -> (i32, i32, i32) {
    %c0_i32 = arith.constant 0 : i32
    %c0_i32_0 = arith.constant 0 : i32
    %c0_i32_1 = arith.constant 0 : i32
    %c0_i32_2 = arith.constant 0 : i32
    return %c0_i32, %c0_i32_0, %c0_i32_1 : i32, i32, i32
  }
  func.func @transform_4(%arg0: i32) -> (i32, i32, i32) {
    %c0_i32 = arith.constant 0 : i32
    %c0_i32_0 = arith.constant 0 : i32
    %c0_i32_1 = arith.constant 0 : i32
    %c0_i32_2 = arith.constant 0 : i32
    return %c0_i32, %c0_i32_0, %c0_i32_1 : i32, i32, i32
  }
  func.func @transform_5(%arg0: i32) -> (i32, i32) {
    %c0_i32 = arith.constant 0 : i32
    %c0_i32_0 = arith.constant 0 : i32
    %c0_i32_1 = arith.constant 0 : i32
    return %c0_i32, %c0_i32_0 : i32, i32
  }
  func.func @transform_6(%arg0: i32) -> (i32, i32) {
    %c0_i32 = arith.constant 0 : i32
    %c0_i32_0 = arith.constant 0 : i32
    %c0_i32_1 = arith.constant 0 : i32
    return %c0_i32, %c0_i32_0 : i32, i32
  }
  func.func @transform_7(%arg0: i32) -> (i32, i32) {
    %c0_i32 = arith.constant 0 : i32
    %c0_i32_0 = arith.constant 0 : i32
    %c0_i32_1 = arith.constant 0 : i32
    return %c0_i32, %c0_i32_0 : i32, i32
  }
  func.func @transform_8(%arg0: i32) -> (i32, i32, i32) {
    %c0_i32 = arith.constant 0 : i32
    %c0_i32_0 = arith.constant 0 : i32
    %c0_i32_1 = arith.constant 0 : i32
    return %arg0, %c0_i32, %c0_i32_0 : i32, i32, i32
  }
}

</mosaic_0001>

<llo_original>
// kernel: residual_block_pallas.2
$region0: #{residual_block_pallas.2}
  #allocation0 [shape = 'u32[]', space=smem, size = 0x4, offset = 0x4, fixed_abs, tag = 'smem constant byte address 0x4 - core index']
  #allocation1 [shape = 'u32[144,128]{1,0:T(1,128)}', space=vmem, size = 0x12000, scoped, tag = 'internal scratch']
  #allocation2 [shape = 'bf16[26,128]{1,0:T(8,128)(2,1)}', space=vmem, size = 0x2000, scoped, tag = 'scratch operand']
  %s0 = inlined_call_operand.vmem [shape: bf16[2,26,4], index: 0, kind: input, shape index: {}]
  %s1 = inlined_call_operand.vmem [shape: bf16[3,128,128], index: 1, kind: input, shape index: {}]
  %s2 = inlined_call_operand.vmem [shape: f32[2,2,128], index: 2, kind: output, shape index: {}]
  %s3 = sld [smem:[#allocation0]]
  $region41: #{residual_block_pallas.2} parent=0
    _
  %s5 = ssub.s32 1, %s3
  %s6 = scalar_select 0, %s5, %s3
  loop: start=0, step=1, limit=4
  $region2: #{residual_block_pallas.2} parent=0 // loop_pre_header
    _
  $region3: #{residual_block_pallas.2} parent=0 // loop_header
    %s8 = sphi 0, %s12
    %p9 = scmp.ge.s32.totalorder %s8, 4
    %s18 = sphi 0, %s20
    %s21 = sphi 0, %s18
    %s22 = sphi 0, %s21
    %s38 = sphi 0, %s22
    %s42 = sphi 0, %s42
    %s44 = sphi 0, %s42
    %s45 = sphi 0, %s44
    %s59 = sphi 0, %s45
    %s65 = sphi 0, %s67
    %s68 = sphi 0, %s65
    %s69 = sphi 0, %s68
    %s85 = sphi 0, %s69
  $region4: #{residual_block_pallas.2} parent=0 // loop_header_branch
    %11 = sbr.rel (%p9) target = $region8
  $region5: #{residual_block_pallas.2} parent=0 // loop_body
    %s13 = ssub.s32 %s8, 1
    %s14 = ssub.s32 %s8, 2
    %s15 = sadd.s32 %s8, 1
    %s16 = ssub.s32 %s8, %s15
    %p17 = scmp.eq.s32.totalorder %s16, 0
    %s19 = sadd.s32 %s18, 1
    %s20 = scalar_select %p17, %s18, %s19
    %p23 = pneg %p17
    %p24 = scmp.eq.s32.totalorder %s8, 1
    %p25 = por %p23, %p24
    %p26 = scmp.ne.s32.totalorder %s18, %s21
    %p27 = scmp.eq.s32.totalorder %s8, 0
    %p28 = por %p26, %p27
    %p29 = scmp.ne.s32.totalorder %s18, %s21
    %p30 = scmp.eq.s32.totalorder %s13, 1
    %p31 = por %p29, %p30
    %p32 = scmp.ne.s32.totalorder %s21, %s22
    %p33 = scmp.eq.s32.totalorder %s13, 0
    %p34 = por %p32, %p33
    %p35 = scmp.ne.s32.totalorder %s21, %s22
    %p36 = scmp.eq.s32.totalorder %s14, 1
    %p37 = por %p35, %p36
    %p39 = scmp.ne.s32.totalorder %s22, %s38
    %p40 = scmp.eq.s32.totalorder %s14, 0
    %p41 = por %p39, %p40
    %s43 = sadd.s32 %s42, 1
    %p46 = scmp.eq.s32.totalorder %s8, 1
    %p47 = scmp.ne.s32.totalorder %s42, %s44
    %p48 = scmp.eq.s32.totalorder %s8, 0
    %p49 = por %p47, %p48
    %p50 = scmp.ne.s32.totalorder %s42, %s44
    %p51 = scmp.eq.s32.totalorder %s13, 1
    %p52 = por %p50, %p51
    %p53 = scmp.ne.s32.totalorder %s44, %s45
    %p54 = scmp.eq.s32.totalorder %s13, 0
    %p55 = por %p53, %p54
    %p56 = scmp.ne.s32.totalorder %s44, %s45
    %p57 = scmp.eq.s32.totalorder %s14, 1
    %p58 = por %p56, %p57
    %p60 = scmp.ne.s32.totalorder %s45, %s59
    %p61 = scmp.eq.s32.totalorder %s14, 0
    %p62 = por %p60, %p61
    %s63 = ssub.s32 %s8, %s15
    %p64 = scmp.eq.s32.totalorder %s63, 0
    %s66 = sadd.s32 %s65, 1
    %s67 = scalar_select %p64, %s65, %s66
    %p70 = pneg %p64
    %p71 = scmp.eq.s32.totalorder %s8, 1
    %p72 = por %p70, %p71
    %p73 = scmp.ne.s32.totalorder %s65, %s68
    %p74 = scmp.eq.s32.totalorder %s8, 0
    %p75 = por %p73, %p74
    %p76 = scmp.ne.s32.totalorder %s65, %s68
    %p77 = scmp.eq.s32.totalorder %s13, 1
    %p78 = por %p76, %p77
    %p79 = scmp.ne.s32.totalorder %s68, %s69
    %p80 = scmp.eq.s32.totalorder %s13, 0
    %p81 = por %p79, %p80
    %p82 = scmp.ne.s32.totalorder %s68, %s69
    %p83 = scmp.eq.s32.totalorder %s14, 1
    %p84 = por %p82, %p83
    %p86 = scmp.ne.s32.totalorder %s69, %s85
    %p87 = scmp.eq.s32.totalorder %s14, 0
    %p88 = por %p86, %p87
    %p89 = scmp.le.s32.totalorder 1, %s8
    %p90 = scmp.lt.s32.totalorder %s8, 3
    %p91 = pnand %p89, %p90
    %p92 = pneg %p91
    // Predicated region
    $region9: #{residual_block_pallas.2} parent=5 // pred_check
      _
    $region10: #{residual_block_pallas.2} parent=5 // pred_check_branch
      %94 = sbr.rel (%p91) target = $region12
    $region11: #{residual_block_pallas.2} parent=5 // pred_region
      %s95 = ssub.s32 %s8, 1
      // Predicated region
      $region13: #{residual_block_pallas.2} parent=11 // pred_check
        %p96 = pneg %p55
      $region14: #{residual_block_pallas.2} parent=11 // pred_check_branch
        %98 = sbr.rel (%p96) target = $region16
      $region15: #{residual_block_pallas.2} parent=11 // pred_region
        _
      $region16: #{residual_block_pallas.2} parent=11 // pred_fallthru
        _
    $region12: #{residual_block_pallas.2} parent=5 // pred_fallthru
      _
    %p99 = scmp.lt.s32.totalorder %s8, 2
    // Predicated region
    $region17: #{residual_block_pallas.2} parent=5 // pred_check
      %p100 = pneg %p99
    $region18: #{residual_block_pallas.2} parent=5 // pred_check_branch
      %102 = sbr.rel (%p100) target = $region20
    $region19: #{residual_block_pallas.2} parent=5 // pred_region
      // Predicated region
      $region21: #{residual_block_pallas.2} parent=19 // pred_check
        %p103 = pneg %p28
      $region22: #{residual_block_pallas.2} parent=19 // pred_check_branch
        %105 = sbr.rel (%p103) target = $region24
      $region23: #{residual_block_pallas.2} parent=19 // pred_region
        %p106 = scmp.lt.s32.totalorder %s8, 1
        %s107 = scalar_select %p106, %s8, 1
        %s108 = smul.addr %s107, 4
        %s109 = smul.addr %s108, 4
        %s110 = scalar_lea.vmem %s0, %s109
      $region24: #{residual_block_pallas.2} parent=19 // pred_fallthru
        _
    $region20: #{residual_block_pallas.2} parent=5 // pred_fallthru
      _
    %p111 = scmp.le.s32.totalorder 1, %s8
    %p112 = scmp.lt.s32.totalorder %s8, 3
    %p113 = pnand %p111, %p112
    %p114 = pneg %p113
    // Predicated region
    $region25: #{residual_block_pallas.2} parent=5 // pred_check
      _
    $region26: #{residual_block_pallas.2} parent=5 // pred_check_branch
      %116 = sbr.rel (%p113) target = $region28
    $region27: #{residual_block_pallas.2} parent=5 // pred_region
      %s117 = ssub.s32 %s8, 1
      %p118 = scmp.lt.s32.totalorder %s13, 1
      %s119 = scalar_select %p118, %s13, 1
      %s120 = smul.addr %s119, 4
      %s121 = smul.addr %s120, 4
      %s122 = scalar_lea.vmem %s0, %s121
      %p123 = pneg %p34
      %p124 = pneg %p31
      %p125 = pneg %p55
      %p126 = pneg %p52
      %p127 = pneg %p81
      %p128 = pneg %p78
      %p129 = scmp.lt.s32.totalorder %s13, 1
      %s130 = scalar_select %p129, %s13, 1
      %s131 = smul.addr %s130, 2
      %s132 = scalar_lea.vmem %s2, %s131
      %p133 = scmp.lt.s32.totalorder %s13, 1
      %s134 = scalar_select %p133, %s13, 1
      %s135 = smul.addr %s134, 4
      %s136 = smul.addr %s135, 4
      %s137 = scalar_lea.vmem %s0, %s136
      %p138 = scmp.lt.s32.totalorder %s13, 1
      %s139 = scalar_select %p138, %s13, 1
      %s140 = smul.addr %s139, 2
      %s141 = scalar_lea.vmem %s2, %s140
      %143 = vst [vmem:[#allocation2] sm:$0xf] 0
      %144 = vst [vmem:[#allocation2 + $0x4] sm:$0xf] 0
      %145 = vst [vmem:[#allocation2 + $0x8] sm:$0xf] 0
      %146 = vst [vmem:[#allocation2 + $0xc] sm:$0x1] 0
      %v147 = vld [vmem:[%s137] sm:$0xf]
      %v148 = vld [vmem:[%s137 + $0x4] sm:$0xf]
      %v149 = vld [vmem:[%s137 + $0x8] sm:$0xf]
      %v150 = vld [vmem:[%s137 + $0xc] sm:$0x1]
      %vm151 = vcmask 27648
      %152 = vst.msk [vmem:[#allocation2] sm:$0xf] %vm151, %v147
      %153 = vst.msk [vmem:[#allocation2 + $0x4] sm:$0xf] %vm151, %v148
      %154 = vst.msk [vmem:[#allocation2 + $0x8] sm:$0xf] %vm151, %v149
      %vm155 = vcmask 24576
      %156 = vst.msk [vmem:[#allocation2 + $0xc] sm:$0x1] %vm155, %v150
      %v157 = vld [vmem:[#allocation2] sm:$0xf]
      %v158 = vld [vmem:[#allocation2 + $0x4] sm:$0xf]
      %v159 = vld [vmem:[#allocation2 + $0x8] sm:$0xf]
      %v160 = vld [vmem:[%s1] sm:$0xf]
      %v161 = vld [vmem:[%s1 + $0x4] sm:$0xf]
      %v162 = vld [vmem:[%s1 + $0x8] sm:$0xf]
      %v163 = vld [vmem:[%s1 + $0xc] sm:$0xf]
      %v164 = vld [vmem:[%s1 + $0x10] sm:$0xf]
      %v165 = vld [vmem:[%s1 + $0x14] sm:$0xf]
      %v166 = vld [vmem:[%s1 + $0x18] sm:$0xf]
      %v167 = vld [vmem:[%s1 + $0x1c] sm:$0xf]
      %v168 = vld [vmem:[%s1 + $0x20] sm:$0xf]
      %v169 = vld [vmem:[%s1 + $0x24] sm:$0xf]
      %v170 = vld [vmem:[%s1 + $0x28] sm:$0xf]
      %v171 = vld [vmem:[%s1 + $0x2c] sm:$0xf]
      %v172 = vld [vmem:[%s1 + $0x30] sm:$0xf]
      %v173 = vld [vmem:[%s1 + $0x34] sm:$0xf]
      %v174 = vld [vmem:[%s1 + $0x38] sm:$0xf]
      %v175 = vld [vmem:[%s1 + $0x3c] sm:$0xf]
      %v176 = vld [vmem:[#allocation2 + $0xc] sm:$0x1]
      %s177 = scalar_lea.vmem %s1, 64
      %v178 = vld [vmem:[%s177] sm:$0xf]
      %v179 = vld [vmem:[%s177 + $0x4] sm:$0xf]
      %v180 = vld [vmem:[%s177 + $0x8] sm:$0xf]
      %v181 = vld [vmem:[%s177 + $0xc] sm:$0xf]
      %v182 = vld [vmem:[%s177 + $0x10] sm:$0xf]
      %v183 = vld [vmem:[%s177 + $0x14] sm:$0xf]
      %v184 = vld [vmem:[%s177 + $0x18] sm:$0xf]
      %v185 = vld [vmem:[%s177 + $0x1c] sm:$0xf]
      %v186 = vld [vmem:[%s177 + $0x20] sm:$0xf]
      %v187 = vld [vmem:[%s177 + $0x24] sm:$0xf]
      %v188 = vld [vmem:[%s177 + $0x28] sm:$0xf]
      %v189 = vld [vmem:[%s177 + $0x2c] sm:$0xf]
      %v190 = vld [vmem:[%s177 + $0x30] sm:$0xf]
      %v191 = vld [vmem:[%s177 + $0x34] sm:$0xf]
      %v192 = vld [vmem:[%s177 + $0x38] sm:$0xf]
      %v193 = vld [vmem:[%s177 + $0x3c] sm:$0xf]
      %v198 = vunpack.c.l.b16 %v157
      %v199 = vunpack.c.l.b16 %v158
      %v200 = vunpack.c.l.b16 %v159
      %v201 = vunpack.c.l.b16 %v176
      %v202 = vpack.c.b16 %v199, %v198
      %v203 = vpack.c.b16 %v201, %v200
      %vm204 = vsmask.f32 7424
      %v206 = vshrl.u32 %v202, 16
      %v208 = vshll.u32 %v202, 16
      %v210 = vrot.slane %v208, 1
      %v211 = vor.u32 %v206, %v210
      %v213 = vshll.u32 %v203, 16
      %v215 = vrot.slane %v213, 1
      %v216 = vsel %vm204, %v211, %v215
      %v217 = vshrl.u32 %v203, 16
      %v219 = vor.u32 %v217, %v215
      %v238 = vunpack.c.l.b16 %v178
      %v239 = vunpack.c.l.b16 %v179
      %v240 = vunpack.c.l.b16 %v180
      %v241 = vunpack.c.l.b16 %v181
      %v242 = vunpack.c.l.b16 %v182
      %v243 = vunpack.c.l.b16 %v183
      %v244 = vunpack.c.l.b16 %v184
      %v245 = vunpack.c.l.b16 %v185
      %v246 = vunpack.c.l.b16 %v186
      %v247 = vunpack.c.l.b16 %v187
      %v248 = vunpack.c.l.b16 %v188
      %v249 = vunpack.c.l.b16 %v189
      %v250 = vunpack.c.l.b16 %v190
      %v251 = vunpack.c.l.b16 %v191
      %v252 = vunpack.c.l.b16 %v192
      %v253 = vunpack.c.l.b16 %v193
      %v254 = vpack.c.b16 %v239, %v238
      %v255 = vpack.c.b16 %v241, %v240
      %v256 = vpack.c.b16 %v243, %v242
      %v257 = vpack.c.b16 %v245, %v244
      %v258 = vpack.c.b16 %v247, %v246
      %v259 = vpack.c.b16 %v249, %v248
      %v260 = vpack.c.b16 %v251, %v250
      %v261 = vpack.c.b16 %v253, %v252
      %270 = vmatprep.subr.bf16.mxu0 0
      %271 = vmatpush1.bf16.msra.mxu0 %v254
      %272 = vmatprep.subr.bf16.mxu0 0
      %273 = vmatpush1.bf16.msra.mxu0 %v255
      %274 = vmatprep.subr.bf16.mxu0 0
      %275 = vmatpush1.bf16.msra.mxu0 %v256
      %276 = vmatprep.subr.bf16.mxu0 0
      %277 = vmatpush1.bf16.msra.mxu0 %v257
      %278 = vmatprep.subr.bf16.mxu0 0
      %279 = vmatpush1.bf16.msra.mxu0 %v258
      %280 = vmatprep.subr.bf16.mxu0 0
      %281 = vmatpush1.bf16.msra.mxu0 %v259
      %282 = vmatprep.subr.bf16.mxu0 0
      %283 = vmatpush1.bf16.msra.mxu0 %v260
      %284 = vmatprep.subr.bf16.mxu0 0
      %285 = vmatpush1.bf16.msra.mxu0 %v261
      %286 = vmatprep.subr.bf16.mxu0 0
      %287 = vmatpush1.bf16.msra.mxu0 0
      %288 = vmatprep.subr.bf16.mxu0 0
      %289 = vmatpush1.bf16.msra.mxu0 0
      %290 = vmatprep.subr.bf16.mxu0 0
      %291 = vmatpush1.bf16.msra.mxu0 0
      %292 = vmatprep.subr.bf16.mxu0 0
      %293 = vmatpush1.bf16.msra.mxu0 0
      %294 = vmatprep.subr.bf16.mxu0 0
      %295 = vmatpush1.bf16.msra.mxu0 0
      %296 = vmatprep.subr.bf16.mxu0 0
      %297 = vmatpush1.bf16.msra.mxu0 0
      %298 = vmatprep.subr.bf16.mxu0 0
      %299 = vmatpush1.bf16.msra.mxu0 0
      %300 = vmatprep.subr.bf16.mxu0 0
      %301 = vmatpush1.bf16.msra.mxu0 0
      %302 = vmatprep.mubr.bf16.mxu0 0
      %303 = vmatmul.mubr.bf16.gmra.mrb[0].mxu0 %v216
      %v304 = vpop.f32.mrb[0].mxu0
      %v305 = vadd.f32 0.0, %v304
      %v306 = vpop.f32.mrb[0].mxu0
      %v307 = vpop.f32.mrb[0].mxu0
      %v308 = vadd.f32 0.0, %v307
      %v309 = vpop.f32.mrb[0].mxu0
      %310 = vmatprep.mubr.bf16.mxu0 0
      %311 = vmatmul.mubr.bf16.gmra.mrb[0].mxu0 %v219
      %v312 = vpop.f32.mrb[0].mxu0
      %v313 = vadd.f32 0.0, %v312
      %v314 = vpop.f32.mrb[0].mxu0
      %v315 = vpop.f32.mrb[0].mxu0
      %v316 = vpop.f32.mrb[0].mxu0
      %317 = vdwg.mxu0
      %v318 = vpack.c.b16 %v200, %v200
      %v337 = vunpack.c.l.b16 %v160
      %v338 = vunpack.c.l.b16 %v161
      %v339 = vunpack.c.l.b16 %v162
      %v340 = vunpack.c.l.b16 %v163
      %v341 = vunpack.c.l.b16 %v164
      %v342 = vunpack.c.l.b16 %v165
      %v343 = vunpack.c.l.b16 %v166
      %v344 = vunpack.c.l.b16 %v167
      %v345 = vunpack.c.l.b16 %v168
      %v346 = vunpack.c.l.b16 %v169
      %v347 = vunpack.c.l.b16 %v170
      %v348 = vunpack.c.l.b16 %v171
      %v349 = vunpack.c.l.b16 %v172
      %v350 = vunpack.c.l.b16 %v173
      %v351 = vunpack.c.l.b16 %v174
      %v352 = vunpack.c.l.b16 %v175
      %v353 = vpack.c.b16 %v338, %v337
      %v354 = vpack.c.b16 %v340, %v339
      %v355 = vpack.c.b16 %v342, %v341
      %v356 = vpack.c.b16 %v344, %v343
      %v357 = vpack.c.b16 %v346, %v345
      %v358 = vpack.c.b16 %v348, %v347
      %v359 = vpack.c.b16 %v350, %v349
      %v360 = vpack.c.b16 %v352, %v351
      %369 = vmatprep.subr.bf16.mxu0 0
      %370 = vmatpush1.bf16.msra.mxu0 %v353
      %371 = vmatprep.subr.bf16.mxu0 0
      %372 = vmatpush1.bf16.msra.mxu0 %v354
      %373 = vmatprep.subr.bf16.mxu0 0
      %374 = vmatpush1.bf16.msra.mxu0 %v355
      %375 = vmatprep.subr.bf16.mxu0 0
      %376 = vmatpush1.bf16.msra.mxu0 %v356
      %377 = vmatprep.subr.bf16.mxu0 0
      %378 = vmatpush1.bf16.msra.mxu0 %v357
      %379 = vmatprep.subr.bf16.mxu0 0
      %380 = vmatpush1.bf16.msra.mxu0 %v358
      %381 = vmatprep.subr.bf16.mxu0 0
      %382 = vmatpush1.bf16.msra.mxu0 %v359
      %383 = vmatprep.subr.bf16.mxu0 0
      %384 = vmatpush1.bf16.msra.mxu0 %v360
      %385 = vmatprep.subr.bf16.mxu0 0
      %386 = vmatpush1.bf16.msra.mxu0 0
      %387 = vmatprep.subr.bf16.mxu0 0
      %388 = vmatpush1.bf16.msra.mxu0 0
      %389 = vmatprep.subr.bf16.mxu0 0
      %390 = vmatpush1.bf16.msra.mxu0 0
      %391 = vmatprep.subr.bf16.mxu0 0
      %392 = vmatpush1.bf16.msra.mxu0 0
      %393 = vmatprep.subr.bf16.mxu0 0
      %394 = vmatpush1.bf16.msra.mxu0 0
      %395 = vmatprep.subr.bf16.mxu0 0
      %396 = vmatpush1.bf16.msra.mxu0 0
      %397 = vmatprep.subr.bf16.mxu0 0
      %398 = vmatpush1.bf16.msra.mxu0 0
      %399 = vmatprep.subr.bf16.mxu0 0
      %400 = vmatpush1.bf16.msra.mxu0 0
      %401 = vmatprep.mubr.bf16.mxu0 0
      %402 = vmatmul.mubr.bf16.gmra.mrb[0].mxu0 %v202
      %v403 = vpop.f32.mrb[0].mxu0
      %v404 = vadd.f32 %v305, %v403
      %v405 = vpop.f32.mrb[0].mxu0
      %v406 = vpop.f32.mrb[0].mxu0
      %v407 = vadd.f32 %v308, %v406
      %v408 = vpop.f32.mrb[0].mxu0
      %409 = vmatprep.mubr.bf16.mxu0 0
      %410 = vmatmul.mubr.bf16.gmra.mrb[0].mxu0 %v318
      %v411 = vpop.f32.mrb[0].mxu0
      %v412 = vadd.f32 %v313, %v411
      %v413 = vpop.f32.mrb[0].mxu0
      %v414 = vpop.f32.mrb[0].mxu0
      %v415 = vpop.f32.mrb[0].mxu0
      %416 = vdwg.mxu0
      %v417 = vld [vmem:[#allocation2] sm:$0xe]
      %s418 = scalar_lea.vmem %s1, 128
      %v419 = vld [vmem:[%s418] sm:$0xf]
      %v420 = vld [vmem:[%s418 + $0x4] sm:$0xf]
      %v421 = vld [vmem:[%s418 + $0x8] sm:$0xf]
      %v422 = vld [vmem:[%s418 + $0xc] sm:$0xf]
      %v423 = vld [vmem:[%s418 + $0x10] sm:$0xf]
      %v424 = vld [vmem:[%s418 + $0x14] sm:$0xf]
      %v425 = vld [vmem:[%s418 + $0x18] sm:$0xf]
      %v426 = vld [vmem:[%s418 + $0x1c] sm:$0xf]
      %v427 = vld [vmem:[%s418 + $0x20] sm:$0xf]
      %v428 = vld [vmem:[%s418 + $0x24] sm:$0xf]
      %v429 = vld [vmem:[%s418 + $0x28] sm:$0xf]
      %v430 = vld [vmem:[%s418 + $0x2c] sm:$0xf]
      %v431 = vld [vmem:[%s418 + $0x30] sm:$0xf]
      %v432 = vld [vmem:[%s418 + $0x34] sm:$0xf]
      %v433 = vld [vmem:[%s418 + $0x38] sm:$0xf]
      %v434 = vld [vmem:[%s418 + $0x3c] sm:$0xf]
      %v436 = vunpack.c.l.b16 %v417
      %v437 = vpack.c.b16 %v199, %v436
      %vm438 = vcmask 1046528
      %v439 = vrot.slane %v437, 1
      %v440 = vrot.slane %v203, 1
      %v441 = vsel %vm438, %v439, %v440
      %v460 = vunpack.c.l.b16 %v419
      %v461 = vunpack.c.l.b16 %v420
      %v462 = vunpack.c.l.b16 %v421
      %v463 = vunpack.c.l.b16 %v422
      %v464 = vunpack.c.l.b16 %v423
      %v465 = vunpack.c.l.b16 %v424
      %v466 = vunpack.c.l.b16 %v425
      %v467 = vunpack.c.l.b16 %v426
      %v468 = vunpack.c.l.b16 %v427
      %v469 = vunpack.c.l.b16 %v428
      %v470 = vunpack.c.l.b16 %v429
      %v471 = vunpack.c.l.b16 %v430
      %v472 = vunpack.c.l.b16 %v431
      %v473 = vunpack.c.l.b16 %v432
      %v474 = vunpack.c.l.b16 %v433
      %v475 = vunpack.c.l.b16 %v434
      %v476 = vpack.c.b16 %v461, %v460
      %v477 = vpack.c.b16 %v463, %v462
      %v478 = vpack.c.b16 %v465, %v464
      %v479 = vpack.c.b16 %v467, %v466
      %v480 = vpack.c.b16 %v469, %v468
      %v481 = vpack.c.b16 %v471, %v470
      %v482 = vpack.c.b16 %v473, %v472
      %v483 = vpack.c.b16 %v475, %v474
      %492 = vmatprep.subr.bf16.mxu0 0
      %493 = vmatpush1.bf16.msra.mxu0 %v476
      %494 = vmatprep.subr.bf16.mxu0 0
      %495 = vmatpush1.bf16.msra.mxu0 %v477
      %496 = vmatprep.subr.bf16.mxu0 0
      %497 = vmatpush1.bf16.msra.mxu0 %v478
      %498 = vmatprep.subr.bf16.mxu0 0
      %499 = vmatpush1.bf16.msra.mxu0 %v479
      %500 = vmatprep.subr.bf16.mxu0 0
      %501 = vmatpush1.bf16.msra.mxu0 %v480
      %502 = vmatprep.subr.bf16.mxu0 0
      %503 = vmatpush1.bf16.msra.mxu0 %v481
      %504 = vmatprep.subr.bf16.mxu0 0
      %505 = vmatpush1.bf16.msra.mxu0 %v482
      %506 = vmatprep.subr.bf16.mxu0 0
      %507 = vmatpush1.bf16.msra.mxu0 %v483
      %508 = vmatprep.subr.bf16.mxu0 0
      %509 = vmatpush1.bf16.msra.mxu0 0
      %510 = vmatprep.subr.bf16.mxu0 0
      %511 = vmatpush1.bf16.msra.mxu0 0
      %512 = vmatprep.subr.bf16.mxu0 0
      %513 = vmatpush1.bf16.msra.mxu0 0
      %514 = vmatprep.subr.bf16.mxu0 0
      %515 = vmatpush1.bf16.msra.mxu0 0
      %516 = vmatprep.subr.bf16.mxu0 0
      %517 = vmatpush1.bf16.msra.mxu0 0
      %518 = vmatprep.subr.bf16.mxu0 0
      %519 = vmatpush1.bf16.msra.mxu0 0
      %520 = vmatprep.subr.bf16.mxu0 0
      %521 = vmatpush1.bf16.msra.mxu0 0
      %522 = vmatprep.subr.bf16.mxu0 0
      %523 = vmatpush1.bf16.msra.mxu0 0
      %524 = vmatprep.mubr.bf16.mxu0 0
      %525 = vmatmul.mubr.bf16.gmra.mrb[0].mxu0 %v441
      %v526 = vpop.f32.mrb[0].mxu0
      %v527 = vadd.f32 0.0, %v526
      %v528 = vpop.f32.mrb[0].mxu0
      %v529 = vpop.f32.mrb[0].mxu0
      %v530 = vadd.f32 0.0, %v529
      %v531 = vpop.f32.mrb[0].mxu0
      %532 = vmatprep.mubr.bf16.mxu0 0
      %533 = vmatmul.mubr.bf16.gmra.mrb[0].mxu0 %v440
      %v534 = vpop.f32.mrb[0].mxu0
      %v535 = vadd.f32 0.0, %v534
      %v536 = vpop.f32.mrb[0].mxu0
      %v537 = vpop.f32.mrb[0].mxu0
      %v538 = vpop.f32.mrb[0].mxu0
      %539 = vdwg.mxu0
      %v540 = vadd.f32 %v404, %v527
      %v541 = vadd.f32 %v407, %v530
      %v542 = vadd.f32 %v412, %v535
      %v543 = vadd.f32 %v540, %v541
      %v544 = vadd.f32 %v543, %v542
      %v545 = vrot.slane %v544, 4
      %v546 = vadd.f32 %v544, %v545
      %v547 = vrot.slane %v546, 2
      %v548 = vadd.f32 %v546, %v547
      %v549 = vrot.slane %v548, 1
      %v550 = vadd.f32 %v548, %v549
      %551 = vst [vmem:[%s141] sm:$0x1] %v550
      %v552 = vmul.f32 %v540, %v540
      %v553 = vmul.f32 %v541, %v541
      %v554 = vmul.f32 %v542, %v542
      %v555 = vadd.f32 %v552, %v553
      %v556 = vadd.f32 %v555, %v554
      %v557 = vrot.slane %v556, 4
      %v558 = vadd.f32 %v556, %v557
      %v559 = vrot.slane %v558, 2
      %v560 = vadd.f32 %v558, %v559
      %v561 = vrot.slane %v560, 1
      %v562 = vadd.f32 %v560, %v561
      %563 = vst [vmem:[%s141 + $0x1] sm:$0x1] %v562
      %p564 = scmp.lt.s32.totalorder %s13, 1
      %s565 = scalar_select %p564, %s13, 1
      %s566 = smul.addr %s565, 2
      %s567 = scalar_lea.vmem %s2, %s566
      // Predicated region
      $region29: #{residual_block_pallas.2} parent=27 // pred_check
        %p568 = pneg %p78
      $region30: #{residual_block_pallas.2} parent=27 // pred_check_branch
        %570 = sbr.rel (%p568) target = $region32
      $region31: #{residual_block_pallas.2} parent=27 // pred_region
        _
      $region32: #{residual_block_pallas.2} parent=27 // pred_fallthru
        _
    $region28: #{residual_block_pallas.2} parent=5 // pred_fallthru
      _
    %p571 = scmp.le.s32.totalorder 2, %s8
    // Predicated region
    $region33: #{residual_block_pallas.2} parent=5 // pred_check
      %p572 = pneg %p571
    $region34: #{residual_block_pallas.2} parent=5 // pred_check_branch
      %574 = sbr.rel (%p572) target = $region36
    $region35: #{residual_block_pallas.2} parent=5 // pred_region
      %s575 = ssub.s32 %s8, 2
      // Predicated region
      $region37: #{residual_block_pallas.2} parent=35 // pred_check
        %p576 = pneg %p84
      $region38: #{residual_block_pallas.2} parent=35 // pred_check_branch
        %578 = sbr.rel (%p576) target = $region40
      $region39: #{residual_block_pallas.2} parent=35 // pred_region
        %p579 = scmp.lt.s32.totalorder %s14, 1
        %s580 = scalar_select %p579, %s14, 1
        %s581 = smul.addr %s580, 2
        %s582 = scalar_lea.vmem %s2, %s581
      $region40: #{residual_block_pallas.2} parent=35 // pred_fallthru
        _
    $region36: #{residual_block_pallas.2} parent=5 // pred_fallthru
      _
  $region6: #{residual_block_pallas.2} parent=0 // loop_footer
    %s12 = sadd.s32 1, %s8
  $region7: #{residual_block_pallas.2} parent=0 // loop_footer_branch
    %7 = sbr.rel target = $region3
  $region8: #{residual_block_pallas.2} parent=0 // loop_exit
    _

// kernel: residual_block_pallas.3
$region0: #{residual_block_pallas.3}
  #allocation0 [shape = 'u32[]', space=smem, size = 0x4, offset = 0x4, fixed_abs, tag = 'smem constant byte address 0x4 - core index']
  #allocation1 [shape = 'u32[144,128]{1,0:T(1,128)}', space=vmem, size = 0x12000, scoped, tag = 'internal scratch']
  #allocation2 [shape = 'bf16[26,128]{1,0:T(8,128)(2,1)}', space=vmem, size = 0x2000, scoped, tag = 'scratch operand']
  #allocation3 [shape = 'bf16[26,128]{1,0:T(8,128)(2,1)}', space=vmem, size = 0x2000, scoped, tag = 'scratch operand']
  #allocation4 [shape = 'f32[22,128]{1,0:T(8,128)}', space=vmem, size = 0x3000, scoped, tag = 'scratch operand']
  %s0 = inlined_call_operand.vmem [shape: bf16[2,26,4], index: 0, kind: input, shape index: {}]
  %s1 = inlined_call_operand.vmem [shape: f32[1,128], index: 1, kind: input, shape index: {}]
  %s2 = inlined_call_operand.vmem [shape: f32[1,128], index: 2, kind: input, shape index: {}]
  %s3 = inlined_call_operand.vmem [shape: bf16[3,128,128], index: 3, kind: input, shape index: {}]
  %s4 = inlined_call_operand.vmem [shape: bf16[3,128,128], index: 4, kind: input, shape index: {}]
  %s5 = inlined_call_operand.vmem [shape: f32[1,128], index: 5, kind: input, shape index: {}]
  %s6 = inlined_call_operand.vmem [shape: bf16[128,128], index: 6, kind: input, shape index: {}]
  %s7 = inlined_call_operand.vmem [shape: f32[1,128], index: 7, kind: input, shape index: {}]
  %s8 = inlined_call_operand.vmem [shape: f32[2,8,128], index: 8, kind: output, shape index: {}]
  %s9 = sld [smem:[#allocation0]]
  $region65: #{residual_block_pallas.3} parent=0
    _
  %s11 = ssub.s32 1, %s9
  %s12 = scalar_select 0, %s11, %s9
  loop: start=0, step=1, limit=4
  $region2: #{residual_block_pallas.3} parent=0 // loop_pre_header
    _
  $region3: #{residual_block_pallas.3} parent=0 // loop_header
    %s14 = sphi 0, %s18
    %p15 = scmp.ge.s32.totalorder %s14, 4
    %s24 = sphi 0, %s26
    %s27 = sphi 0, %s24
    %s28 = sphi 0, %s27
    %s44 = sphi 0, %s28
    %s48 = sphi 0, %s48
    %s50 = sphi 0, %s48
    %s51 = sphi 0, %s50
    %s65 = sphi 0, %s51
    %s69 = sphi 0, %s69
    %s71 = sphi 0, %s69
    %s72 = sphi 0, %s71
    %s86 = sphi 0, %s72
    %s90 = sphi 0, %s90
    %s92 = sphi 0, %s90
    %s93 = sphi 0, %s92
    %s107 = sphi 0, %s93
    %s111 = sphi 0, %s111
    %s113 = sphi 0, %s111
    %s114 = sphi 0, %s113
    %s128 = sphi 0, %s114
    %s132 = sphi 0, %s132
    %s134 = sphi 0, %s132
    %s135 = sphi 0, %s134
    %s149 = sphi 0, %s135
    %s153 = sphi 0, %s153
    %s155 = sphi 0, %s153
    %s156 = sphi 0, %s155
    %s170 = sphi 0, %s156
    %s174 = sphi 0, %s174
    %s176 = sphi 0, %s174
    %s177 = sphi 0, %s176
    %s191 = sphi 0, %s177
    %s197 = sphi 0, %s199
    %s200 = sphi 0, %s197
    %s201 = sphi 0, %s200
    %s217 = sphi 0, %s201
  $region4: #{residual_block_pallas.3} parent=0 // loop_header_branch
    %17 = sbr.rel (%p15) target = $region8
  $region5: #{residual_block_pallas.3} parent=0 // loop_body
    %s19 = ssub.s32 %s14, 1
    %s20 = ssub.s32 %s14, 2
    %s21 = sadd.s32 %s14, 1
    %s22 = ssub.s32 %s14, %s21
    %p23 = scmp.eq.s32.totalorder %s22, 0
    %s25 = sadd.s32 %s24, 1
    %s26 = scalar_select %p23, %s24, %s25
    %p29 = pneg %p23
    %p30 = scmp.eq.s32.totalorder %s14, 1
    %p31 = por %p29, %p30
    %p32 = scmp.ne.s32.totalorder %s24, %s27
    %p33 = scmp.eq.s32.totalorder %s14, 0
    %p34 = por %p32, %p33
    %p35 = scmp.ne.s32.totalorder %s24, %s27
    %p36 = scmp.eq.s32.totalorder %s19, 1
    %p37 = por %p35, %p36
    %p38 = scmp.ne.s32.totalorder %s27, %s28
    %p39 = scmp.eq.s32.totalorder %s19, 0
    %p40 = por %p38, %p39
    %p41 = scmp.ne.s32.totalorder %s27, %s28
    %p42 = scmp.eq.s32.totalorder %s20, 1
    %p43 = por %p41, %p42
    %p45 = scmp.ne.s32.totalorder %s28, %s44
    %p46 = scmp.eq.s32.totalorder %s20, 0
    %p47 = por %p45, %p46
    %s49 = sadd.s32 %s48, 1
    %p52 = scmp.eq.s32.totalorder %s14, 1
    %p53 = scmp.ne.s32.totalorder %s48, %s50
    %p54 = scmp.eq.s32.totalorder %s14, 0
    %p55 = por %p53, %p54
    %p56 = scmp.ne.s32.totalorder %s48, %s50
    %p57 = scmp.eq.s32.totalorder %s19, 1
    %p58 = por %p56, %p57
    %p59 = scmp.ne.s32.totalorder %s50, %s51
    %p60 = scmp.eq.s32.totalorder %s19, 0
    %p61 = por %p59, %p60
    %p62 = scmp.ne.s32.totalorder %s50, %s51
    %p63 = scmp.eq.s32.totalorder %s20, 1
    %p64 = por %p62, %p63
    %p66 = scmp.ne.s32.totalorder %s51, %s65
    %p67 = scmp.eq.s32.totalorder %s20, 0
    %p68 = por %p66, %p67
    %s70 = sadd.s32 %s69, 1
    %p73 = scmp.eq.s32.totalorder %s14, 1
    %p74 = scmp.ne.s32.totalorder %s69, %s71
    %p75 = scmp.eq.s32.totalorder %s14, 0
    %p76 = por %p74, %p75
    %p77 = scmp.ne.s32.totalorder %s69, %s71
    %p78 = scmp.eq.s32.totalorder %s19, 1
    %p79 = por %p77, %p78
    %p80 = scmp.ne.s32.totalorder %s71, %s72
    %p81 = scmp.eq.s32.totalorder %s19, 0
    %p82 = por %p80, %p81
    %p83 = scmp.ne.s32.totalorder %s71, %s72
    %p84 = scmp.eq.s32.totalorder %s20, 1
    %p85 = por %p83, %p84
    %p87 = scmp.ne.s32.totalorder %s72, %s86
    %p88 = scmp.eq.s32.totalorder %s20, 0
    %p89 = por %p87, %p88
    %s91 = sadd.s32 %s90, 1
    %p94 = scmp.eq.s32.totalorder %s14, 1
    %p95 = scmp.ne.s32.totalorder %s90, %s92
    %p96 = scmp.eq.s32.totalorder %s14, 0
    %p97 = por %p95, %p96
    %p98 = scmp.ne.s32.totalorder %s90, %s92
    %p99 = scmp.eq.s32.totalorder %s19, 1
    %p100 = por %p98, %p99
    %p101 = scmp.ne.s32.totalorder %s92, %s93
    %p102 = scmp.eq.s32.totalorder %s19, 0
    %p103 = por %p101, %p102
    %p104 = scmp.ne.s32.totalorder %s92, %s93
    %p105 = scmp.eq.s32.totalorder %s20, 1
    %p106 = por %p104, %p105
    %p108 = scmp.ne.s32.totalorder %s93, %s107
    %p109 = scmp.eq.s32.totalorder %s20, 0
    %p110 = por %p108, %p109
    %s112 = sadd.s32 %s111, 1
    %p115 = scmp.eq.s32.totalorder %s14, 1
    %p116 = scmp.ne.s32.totalorder %s111, %s113
    %p117 = scmp.eq.s32.totalorder %s14, 0
    %p118 = por %p116, %p117
    %p119 = scmp.ne.s32.totalorder %s111, %s113
    %p120 = scmp.eq.s32.totalorder %s19, 1
    %p121 = por %p119, %p120
    %p122 = scmp.ne.s32.totalorder %s113, %s114
    %p123 = scmp.eq.s32.totalorder %s19, 0
    %p124 = por %p122, %p123
    %p125 = scmp.ne.s32.totalorder %s113, %s114
    %p126 = scmp.eq.s32.totalorder %s20, 1
    %p127 = por %p125, %p126
    %p129 = scmp.ne.s32.totalorder %s114, %s128
    %p130 = scmp.eq.s32.totalorder %s20, 0
    %p131 = por %p129, %p130
    %s133 = sadd.s32 %s132, 1
    %p136 = scmp.eq.s32.totalorder %s14, 1
    %p137 = scmp.ne.s32.totalorder %s132, %s134
    %p138 = scmp.eq.s32.totalorder %s14, 0
    %p139 = por %p137, %p138
    %p140 = scmp.ne.s32.totalorder %s132, %s134
    %p141 = scmp.eq.s32.totalorder %s19, 1
    %p142 = por %p140, %p141
    %p143 = scmp.ne.s32.totalorder %s134, %s135
    %p144 = scmp.eq.s32.totalorder %s19, 0
    %p145 = por %p143, %p144
    %p146 = scmp.ne.s32.totalorder %s134, %s135
    %p147 = scmp.eq.s32.totalorder %s20, 1
    %p148 = por %p146, %p147
    %p150 = scmp.ne.s32.totalorder %s135, %s149
    %p151 = scmp.eq.s32.totalorder %s20, 0
    %p152 = por %p150, %p151
    %s154 = sadd.s32 %s153, 1
    %p157 = scmp.eq.s32.totalorder %s14, 1
    %p158 = scmp.ne.s32.totalorder %s153, %s155
    %p159 = scmp.eq.s32.totalorder %s14, 0
    %p160 = por %p158, %p159
    %p161 = scmp.ne.s32.totalorder %s153, %s155
    %p162 = scmp.eq.s32.totalorder %s19, 1
    %p163 = por %p161, %p162
    %p164 = scmp.ne.s32.totalorder %s155, %s156
    %p165 = scmp.eq.s32.totalorder %s19, 0
    %p166 = por %p164, %p165
    %p167 = scmp.ne.s32.totalorder %s155, %s156
    %p168 = scmp.eq.s32.totalorder %s20, 1
    %p169 = por %p167, %p168
    %p171 = scmp.ne.s32.totalorder %s156, %s170
    %p172 = scmp.eq.s32.totalorder %s20, 0
    %p173 = por %p171, %p172
    %s175 = sadd.s32 %s174, 1
    %p178 = scmp.eq.s32.totalorder %s14, 1
    %p179 = scmp.ne.s32.totalorder %s174, %s176
    %p180 = scmp.eq.s32.totalorder %s14, 0
    %p181 = por %p179, %p180
    %p182 = scmp.ne.s32.totalorder %s174, %s176
    %p183 = scmp.eq.s32.totalorder %s19, 1
    %p184 = por %p182, %p183
    %p185 = scmp.ne.s32.totalorder %s176, %s177
    %p186 = scmp.eq.s32.totalorder %s19, 0
    %p187 = por %p185, %p186
    %p188 = scmp.ne.s32.totalorder %s176, %s177
    %p189 = scmp.eq.s32.totalorder %s20, 1
    %p190 = por %p188, %p189
    %p192 = scmp.ne.s32.totalorder %s177, %s191
    %p193 = scmp.eq.s32.totalorder %s20, 0
    %p194 = por %p192, %p193
    %s195 = ssub.s32 %s14, %s21
    %p196 = scmp.eq.s32.totalorder %s195, 0
    %s198 = sadd.s32 %s197, 1
    %s199 = scalar_select %p196, %s197, %s198
    %p202 = pneg %p196
    %p203 = scmp.eq.s32.totalorder %s14, 1
    %p204 = por %p202, %p203
    %p205 = scmp.ne.s32.totalorder %s197, %s200
    %p206 = scmp.eq.s32.totalorder %s14, 0
    %p207 = por %p205, %p206
    %p208 = scmp.ne.s32.totalorder %s197, %s200
    %p209 = scmp.eq.s32.totalorder %s19, 1
    %p210 = por %p208, %p209
    %p211 = scmp.ne.s32.totalorder %s200, %s201
    %p212 = scmp.eq.s32.totalorder %s19, 0
    %p213 = por %p211, %p212
    %p214 = scmp.ne.s32.totalorder %s200, %s201
    %p215 = scmp.eq.s32.totalorder %s20, 1
    %p216 = por %p214, %p215
    %p218 = scmp.ne.s32.totalorder %s201, %s217
    %p219 = scmp.eq.s32.totalorder %s20, 0
    %p220 = por %p218, %p219
    %p221 = scmp.le.s32.totalorder 1, %s14
    %p222 = scmp.lt.s32.totalorder %s14, 3
    %p223 = pnand %p221, %p222
    %p224 = pneg %p223
    // Predicated region
    $region9: #{residual_block_pallas.3} parent=5 // pred_check
      _
    $region10: #{residual_block_pallas.3} parent=5 // pred_check_branch
      %226 = sbr.rel (%p223) target = $region12
    $region11: #{residual_block_pallas.3} parent=5 // pred_region
      %s227 = ssub.s32 %s14, 1
      // Predicated region
      $region13: #{residual_block_pallas.3} parent=11 // pred_check
        %p228 = pneg %p61
      $region14: #{residual_block_pallas.3} parent=11 // pred_check_branch
        %230 = sbr.rel (%p228) target = $region16
      $region15: #{residual_block_pallas.3} parent=11 // pred_region
        _
      $region16: #{residual_block_pallas.3} parent=11 // pred_fallthru
        _
      // Predicated region
      $region17: #{residual_block_pallas.3} parent=11 // pred_check
        %p231 = pneg %p82
      $region18: #{residual_block_pallas.3} parent=11 // pred_check_branch
        %233 = sbr.rel (%p231) target = $region20
      $region19: #{residual_block_pallas.3} parent=11 // pred_region
        _
      $region20: #{residual_block_pallas.3} parent=11 // pred_fallthru
        _
      // Predicated region
      $region21: #{residual_block_pallas.3} parent=11 // pred_check
        %p234 = pneg %p103
      $region22: #{residual_block_pallas.3} parent=11 // pred_check_branch
        %236 = sbr.rel (%p234) target = $region24
      $region23: #{residual_block_pallas.3} parent=11 // pred_region
        _
      $region24: #{residual_block_pallas.3} parent=11 // pred_fallthru
        _
      // Predicated region
      $region25: #{residual_block_pallas.3} parent=11 // pred_check
        %p237 = pneg %p124
      $region26: #{residual_block_pallas.3} parent=11 // pred_check_branch
        %239 = sbr.rel (%p237) target = $region28
      $region27: #{residual_block_pallas.3} parent=11 // pred_region
        _
      $region28: #{residual_block_pallas.3} parent=11 // pred_fallthru
        _
      // Predicated region
      $region29: #{residual_block_pallas.3} parent=11 // pred_check
        %p240 = pneg %p145
      $region30: #{residual_block_pallas.3} parent=11 // pred_check_branch
        %242 = sbr.rel (%p240) target = $region32
      $region31: #{residual_block_pallas.3} parent=11 // pred_region
        _
      $region32: #{residual_block_pallas.3} parent=11 // pred_fallthru
        _
      // Predicated region
      $region33: #{residual_block_pallas.3} parent=11 // pred_check
        %p243 = pneg %p166
      $region34: #{residual_block_pallas.3} parent=11 // pred_check_branch
        %245 = sbr.rel (%p243) target = $region36
      $region35: #{residual_block_pallas.3} parent=11 // pred_region
        _
      $region36: #{residual_block_pallas.3} parent=11 // pred_fallthru
        _
      // Predicated region
      $region37: #{residual_block_pallas.3} parent=11 // pred_check
        %p246 = pneg %p187
      $region38: #{residual_block_pallas.3} parent=11 // pred_check_branch
        %248 = sbr.rel (%p246) target = $region40
      $region39: #{residual_block_pallas.3} parent=11 // pred_region
        _
      $region40: #{residual_block_pallas.3} parent=11 // pred_fallthru
        _
    $region12: #{residual_block_pallas.3} parent=5 // pred_fallthru
      _
    %p249 = scmp.lt.s32.totalorder %s14, 2
    // Predicated region
    $region41: #{residual_block_pallas.3} parent=5 // pred_check
      %p250 = pneg %p249
    $region42: #{residual_block_pallas.3} parent=5 // pred_check_branch
      %252 = sbr.rel (%p250) target = $region44
    $region43: #{residual_block_pallas.3} parent=5 // pred_region
      // Predicated region
      $region45: #{residual_block_pallas.3} parent=43 // pred_check
        %p253 = pneg %p34
      $region46: #{residual_block_pallas.3} parent=43 // pred_check_branch
        %255 = sbr.rel (%p253) target = $region48
      $region47: #{residual_block_pallas.3} parent=43 // pred_region
        %p256 = scmp.lt.s32.totalorder %s14, 1
        %s257 = scalar_select %p256, %s14, 1
        %s258 = smul.addr %s257, 4
        %s259 = smul.addr %s258, 4
        %s260 = scalar_lea.vmem %s0, %s259
      $region48: #{residual_block_pallas.3} parent=43 // pred_fallthru
        _
    $region44: #{residual_block_pallas.3} parent=5 // pred_fallthru
      _
    %p261 = scmp.le.s32.totalorder 1, %s14
    %p262 = scmp.lt.s32.totalorder %s14, 3
    %p263 = pnand %p261, %p262
    %p264 = pneg %p263
    // Predicated region
    $region49: #{residual_block_pallas.3} parent=5 // pred_check
      _
    $region50: #{residual_block_pallas.3} parent=5 // pred_check_branch
      %266 = sbr.rel (%p263) target = $region52
    $region51: #{residual_block_pallas.3} parent=5 // pred_region
      %s267 = ssub.s32 %s14, 1
      %p268 = scmp.lt.s32.totalorder %s19, 1
      %s269 = scalar_select %p268, %s19, 1
      %s270 = smul.addr %s269, 4
      %s271 = smul.addr %s270, 4
      %s272 = scalar_lea.vmem %s0, %s271
      %p273 = pneg %p40
      %p274 = pneg %p37
      %p275 = pneg %p61
      %p276 = pneg %p58
      %p277 = pneg %p82
      %p278 = pneg %p79
      %p279 = pneg %p103
      %p280 = pneg %p100
      %p281 = pneg %p124
      %p282 = pneg %p121
      %p283 = pneg %p145
      %p284 = pneg %p142
      %p285 = pneg %p166
      %p286 = pneg %p163
      %p287 = pneg %p187
      %p288 = pneg %p184
      %p289 = pneg %p213
      %p290 = pneg %p210
      %p291 = scmp.lt.s32.totalorder %s19, 1
      %s292 = scalar_select %p291, %s19, 1
      %s293 = smul.addr %s292, 8
      %s294 = scalar_lea.vmem %s8, %s293
      %p295 = scmp.lt.s32.totalorder %s19, 1
      %s296 = scalar_select %p295, %s19, 1
      %s297 = smul.addr %s296, 4
      %s298 = smul.addr %s297, 4
      %s299 = scalar_lea.vmem %s0, %s298
      %p300 = scmp.lt.s32.totalorder %s19, 1
      %s301 = scalar_select %p300, %s19, 1
      %s302 = smul.addr %s301, 8
      %s303 = scalar_lea.vmem %s8, %s302
      %305 = vst [vmem:[#allocation2] sm:$0xf] 0
      %306 = vst [vmem:[#allocation2 + $0x4] sm:$0xf] 0
      %307 = vst [vmem:[#allocation2 + $0x8] sm:$0xf] 0
      %308 = vst [vmem:[#allocation2 + $0xc] sm:$0x1] 0
      %v309 = vld [vmem:[%s299] sm:$0xf]
      %v310 = vld [vmem:[%s299 + $0x4] sm:$0xf]
      %v311 = vld [vmem:[%s299 + $0x8] sm:$0xf]
      %v312 = vld [vmem:[%s299 + $0xc] sm:$0x1]
      %vm313 = vcmask 27648
      %314 = vst.msk [vmem:[#allocation2] sm:$0xf] %vm313, %v309
      %315 = vst.msk [vmem:[#allocation2 + $0x4] sm:$0xf] %vm313, %v310
      %316 = vst.msk [vmem:[#allocation2 + $0x8] sm:$0xf] %vm313, %v311
      %vm317 = vcmask 24576
      %318 = vst.msk [vmem:[#allocation2 + $0xc] sm:$0x1] %vm317, %v312
      %v319 = vld [vmem:[#allocation2] sm:$0xf]
      %v320 = vld [vmem:[#allocation2 + $0x4] sm:$0xf]
      %v321 = vld [vmem:[#allocation2 + $0x8] sm:$0xf]
      %v322 = vld [vmem:[%s3] sm:$0xf]
      %v323 = vld [vmem:[%s3 + $0x4] sm:$0xf]
      %v324 = vld [vmem:[%s3 + $0x8] sm:$0xf]
      %v325 = vld [vmem:[%s3 + $0xc] sm:$0xf]
      %v326 = vld [vmem:[%s3 + $0x10] sm:$0xf]
      %v327 = vld [vmem:[%s3 + $0x14] sm:$0xf]
      %v328 = vld [vmem:[%s3 + $0x18] sm:$0xf]
      %v329 = vld [vmem:[%s3 + $0x1c] sm:$0xf]
      %v330 = vld [vmem:[%s3 + $0x20] sm:$0xf]
      %v331 = vld [vmem:[%s3 + $0x24] sm:$0xf]
      %v332 = vld [vmem:[%s3 + $0x28] sm:$0xf]
      %v333 = vld [vmem:[%s3 + $0x2c] sm:$0xf]
      %v334 = vld [vmem:[%s3 + $0x30] sm:$0xf]
      %v335 = vld [vmem:[%s3 + $0x34] sm:$0xf]
      %v336 = vld [vmem:[%s3 + $0x38] sm:$0xf]
      %v337 = vld [vmem:[%s3 + $0x3c] sm:$0xf]
      %v338 = vld [vmem:[#allocation2 + $0xc] sm:$0x1]
      %s339 = scalar_lea.vmem %s3, 64
      %v340 = vld [vmem:[%s339] sm:$0xf]
      %v341 = vld [vmem:[%s339 + $0x4] sm:$0xf]
      %v342 = vld [vmem:[%s339 + $0x8] sm:$0xf]
      %v343 = vld [vmem:[%s339 + $0xc] sm:$0xf]
      %v344 = vld [vmem:[%s339 + $0x10] sm:$0xf]
      %v345 = vld [vmem:[%s339 + $0x14] sm:$0xf]
      %v346 = vld [vmem:[%s339 + $0x18] sm:$0xf]
      %v347 = vld [vmem:[%s339 + $0x1c] sm:$0xf]
      %v348 = vld [vmem:[%s339 + $0x20] sm:$0xf]
      %v349 = vld [vmem:[%s339 + $0x24] sm:$0xf]
      %v350 = vld [vmem:[%s339 + $0x28] sm:$0xf]
      %v351 = vld [vmem:[%s339 + $0x2c] sm:$0xf]
      %v352 = vld [vmem:[%s339 + $0x30] sm:$0xf]
      %v353 = vld [vmem:[%s339 + $0x34] sm:$0xf]
      %v354 = vld [vmem:[%s339 + $0x38] sm:$0xf]
      %v355 = vld [vmem:[%s339 + $0x3c] sm:$0xf]
      %v360 = vunpack.c.l.b16 %v319
      %v361 = vunpack.c.l.b16 %v320
      %v362 = vunpack.c.l.b16 %v321
      %v363 = vunpack.c.l.b16 %v338
      %v364 = vpack.c.b16 %v361, %v360
      %v365 = vpack.c.b16 %v363, %v362
      %vm366 = vsmask.f32 7424
      %v368 = vshrl.u32 %v364, 16
      %v370 = vshll.u32 %v364, 16
      %v372 = vrot.slane %v370, 1
      %v373 = vor.u32 %v368, %v372
      %v375 = vshll.u32 %v365, 16
      %v377 = vrot.slane %v375, 1
      %v378 = vsel %vm366, %v373, %v377
      %v379 = vshrl.u32 %v365, 16
      %v381 = vor.u32 %v379, %v377
      %v400 = vunpack.c.l.b16 %v340
      %v401 = vunpack.c.l.b16 %v341
      %v402 = vunpack.c.l.b16 %v342
      %v403 = vunpack.c.l.b16 %v343
      %v404 = vunpack.c.l.b16 %v344
      %v405 = vunpack.c.l.b16 %v345
      %v406 = vunpack.c.l.b16 %v346
      %v407 = vunpack.c.l.b16 %v347
      %v408 = vunpack.c.l.b16 %v348
      %v409 = vunpack.c.l.b16 %v349
      %v410 = vunpack.c.l.b16 %v350
      %v411 = vunpack.c.l.b16 %v351
      %v412 = vunpack.c.l.b16 %v352
      %v413 = vunpack.c.l.b16 %v353
      %v414 = vunpack.c.l.b16 %v354
      %v415 = vunpack.c.l.b16 %v355
      %v416 = vpack.c.b16 %v401, %v400
      %v417 = vpack.c.b16 %v403, %v402
      %v418 = vpack.c.b16 %v405, %v404
      %v419 = vpack.c.b16 %v407, %v406
      %v420 = vpack.c.b16 %v409, %v408
      %v421 = vpack.c.b16 %v411, %v410
      %v422 = vpack.c.b16 %v413, %v412
      %v423 = vpack.c.b16 %v415, %v414
      %432 = vmatprep.subr.bf16.mxu0 0
      %433 = vmatpush1.bf16.msra.mxu0 %v416
      %434 = vmatprep.subr.bf16.mxu0 0
      %435 = vmatpush1.bf16.msra.mxu0 %v417
      %436 = vmatprep.subr.bf16.mxu0 0
      %437 = vmatpush1.bf16.msra.mxu0 %v418
      %438 = vmatprep.subr.bf16.mxu0 0
      %439 = vmatpush1.bf16.msra.mxu0 %v419
      %440 = vmatprep.subr.bf16.mxu0 0
      %441 = vmatpush1.bf16.msra.mxu0 %v420
      %442 = vmatprep.subr.bf16.mxu0 0
      %443 = vmatpush1.bf16.msra.mxu0 %v421
      %444 = vmatprep.subr.bf16.mxu0 0
      %445 = vmatpush1.bf16.msra.mxu0 %v422
      %446 = vmatprep.subr.bf16.mxu0 0
      %447 = vmatpush1.bf16.msra.mxu0 %v423
      %448 = vmatprep.subr.bf16.mxu0 0
      %449 = vmatpush1.bf16.msra.mxu0 0
      %450 = vmatprep.subr.bf16.mxu0 0
      %451 = vmatpush1.bf16.msra.mxu0 0
      %452 = vmatprep.subr.bf16.mxu0 0
      %453 = vmatpush1.bf16.msra.mxu0 0
      %454 = vmatprep.subr.bf16.mxu0 0
      %455 = vmatpush1.bf16.msra.mxu0 0
      %456 = vmatprep.subr.bf16.mxu0 0
      %457 = vmatpush1.bf16.msra.mxu0 0
      %458 = vmatprep.subr.bf16.mxu0 0
      %459 = vmatpush1.bf16.msra.mxu0 0
      %460 = vmatprep.subr.bf16.mxu0 0
      %461 = vmatpush1.bf16.msra.mxu0 0
      %462 = vmatprep.subr.bf16.mxu0 0
      %463 = vmatpush1.bf16.msra.mxu0 0
      %464 = vmatprep.mubr.bf16.mxu0 0
      %465 = vmatmul.mubr.bf16.gmra.mrb[0].mxu0 %v378
      %v466 = vpop.f32.mrb[0].mxu0
      %v467 = vadd.f32 0.0, %v466
      %v468 = vpop.f32.mrb[0].mxu0
      %v469 = vpop.f32.mrb[0].mxu0
      %v470 = vadd.f32 0.0, %v469
      %v471 = vpop.f32.mrb[0].mxu0
      %472 = vmatprep.mubr.bf16.mxu0 0
      %473 = vmatmul.mubr.bf16.gmra.mrb[0].mxu0 %v381
      %v474 = vpop.f32.mrb[0].mxu0
      %v475 = vadd.f32 0.0, %v474
      %v476 = vpop.f32.mrb[0].mxu0
      %v477 = vpop.f32.mrb[0].mxu0
      %v478 = vpop.f32.mrb[0].mxu0
      %479 = vdwg.mxu0
      %v480 = vpack.c.b16 %v362, %v362
      %v499 = vunpack.c.l.b16 %v322
      %v500 = vunpack.c.l.b16 %v323
      %v501 = vunpack.c.l.b16 %v324
      %v502 = vunpack.c.l.b16 %v325
      %v503 = vunpack.c.l.b16 %v326
      %v504 = vunpack.c.l.b16 %v327
      %v505 = vunpack.c.l.b16 %v328
      %v506 = vunpack.c.l.b16 %v329
      %v507 = vunpack.c.l.b16 %v330
      %v508 = vunpack.c.l.b16 %v331
      %v509 = vunpack.c.l.b16 %v332
      %v510 = vunpack.c.l.b16 %v333
      %v511 = vunpack.c.l.b16 %v334
      %v512 = vunpack.c.l.b16 %v335
      %v513 = vunpack.c.l.b16 %v336
      %v514 = vunpack.c.l.b16 %v337
      %v515 = vpack.c.b16 %v500, %v499
      %v516 = vpack.c.b16 %v502, %v501
      %v517 = vpack.c.b16 %v504, %v503
      %v518 = vpack.c.b16 %v506, %v505
      %v519 = vpack.c.b16 %v508, %v507
      %v520 = vpack.c.b16 %v510, %v509
      %v521 = vpack.c.b16 %v512, %v511
      %v522 = vpack.c.b16 %v514, %v513
      %531 = vmatprep.subr.bf16.mxu0 0
      %532 = vmatpush1.bf16.msra.mxu0 %v515
      %533 = vmatprep.subr.bf16.mxu0 0
      %534 = vmatpush1.bf16.msra.mxu0 %v516
      %535 = vmatprep.subr.bf16.mxu0 0
      %536 = vmatpush1.bf16.msra.mxu0 %v517
      %537 = vmatprep.subr.bf16.mxu0 0
      %538 = vmatpush1.bf16.msra.mxu0 %v518
      %539 = vmatprep.subr.bf16.mxu0 0
      %540 = vmatpush1.bf16.msra.mxu0 %v519
      %541 = vmatprep.subr.bf16.mxu0 0
      %542 = vmatpush1.bf16.msra.mxu0 %v520
      %543 = vmatprep.subr.bf16.mxu0 0
      %544 = vmatpush1.bf16.msra.mxu0 %v521
      %545 = vmatprep.subr.bf16.mxu0 0
      %546 = vmatpush1.bf16.msra.mxu0 %v522
      %547 = vmatprep.subr.bf16.mxu0 0
      %548 = vmatpush1.bf16.msra.mxu0 0
      %549 = vmatprep.subr.bf16.mxu0 0
      %550 = vmatpush1.bf16.msra.mxu0 0
      %551 = vmatprep.subr.bf16.mxu0 0
      %552 = vmatpush1.bf16.msra.mxu0 0
      %553 = vmatprep.subr.bf16.mxu0 0
      %554 = vmatpush1.bf16.msra.mxu0 0
      %555 = vmatprep.subr.bf16.mxu0 0
      %556 = vmatpush1.bf16.msra.mxu0 0
      %557 = vmatprep.subr.bf16.mxu0 0
      %558 = vmatpush1.bf16.msra.mxu0 0
      %559 = vmatprep.subr.bf16.mxu0 0
      %560 = vmatpush1.bf16.msra.mxu0 0
      %561 = vmatprep.subr.bf16.mxu0 0
      %562 = vmatpush1.bf16.msra.mxu0 0
      %563 = vmatprep.mubr.bf16.mxu0 0
      %564 = vmatmul.mubr.bf16.gmra.mrb[0].mxu0 %v364
      %v565 = vpop.f32.mrb[0].mxu0
      %v566 = vadd.f32 %v467, %v565
      %v567 = vpop.f32.mrb[0].mxu0
      %v568 = vpop.f32.mrb[0].mxu0
      %v569 = vadd.f32 %v470, %v568
      %v570 = vpop.f32.mrb[0].mxu0
      %571 = vmatprep.mubr.bf16.mxu0 0
      %572 = vmatmul.mubr.bf16.gmra.mrb[0].mxu0 %v480
      %v573 = vpop.f32.mrb[0].mxu0
      %v574 = vadd.f32 %v475, %v573
      %v575 = vpop.f32.mrb[0].mxu0
      %v576 = vpop.f32.mrb[0].mxu0
      %v577 = vpop.f32.mrb[0].mxu0
      %578 = vdwg.mxu0
      %v579 = vld [vmem:[#allocation2] sm:$0xe]
      %s580 = scalar_lea.vmem %s3, 128
      %v581 = vld [vmem:[%s580] sm:$0xf]
      %v582 = vld [vmem:[%s580 + $0x4] sm:$0xf]
      %v583 = vld [vmem:[%s580 + $0x8] sm:$0xf]
      %v584 = vld [vmem:[%s580 + $0xc] sm:$0xf]
      %v585 = vld [vmem:[%s580 + $0x10] sm:$0xf]
      %v586 = vld [vmem:[%s580 + $0x14] sm:$0xf]
      %v587 = vld [vmem:[%s580 + $0x18] sm:$0xf]
      %v588 = vld [vmem:[%s580 + $0x1c] sm:$0xf]
      %v589 = vld [vmem:[%s580 + $0x20] sm:$0xf]
      %v590 = vld [vmem:[%s580 + $0x24] sm:$0xf]
      %v591 = vld [vmem:[%s580 + $0x28] sm:$0xf]
      %v592 = vld [vmem:[%s580 + $0x2c] sm:$0xf]
      %v593 = vld [vmem:[%s580 + $0x30] sm:$0xf]
      %v594 = vld [vmem:[%s580 + $0x34] sm:$0xf]
      %v595 = vld [vmem:[%s580 + $0x38] sm:$0xf]
      %v596 = vld [vmem:[%s580 + $0x3c] sm:$0xf]
      %v598 = vunpack.c.l.b16 %v579
      %v599 = vpack.c.b16 %v361, %v598
      %vm600 = vcmask 1046528
      %v601 = vrot.slane %v599, 1
      %v602 = vrot.slane %v365, 1
      %v603 = vsel %vm600, %v601, %v602
      %v622 = vunpack.c.l.b16 %v581
      %v623 = vunpack.c.l.b16 %v582
      %v624 = vunpack.c.l.b16 %v583
      %v625 = vunpack.c.l.b16 %v584
      %v626 = vunpack.c.l.b16 %v585
      %v627 = vunpack.c.l.b16 %v586
      %v628 = vunpack.c.l.b16 %v587
      %v629 = vunpack.c.l.b16 %v588
      %v630 = vunpack.c.l.b16 %v589
      %v631 = vunpack.c.l.b16 %v590
      %v632 = vunpack.c.l.b16 %v591
      %v633 = vunpack.c.l.b16 %v592
      %v634 = vunpack.c.l.b16 %v593
      %v635 = vunpack.c.l.b16 %v594
      %v636 = vunpack.c.l.b16 %v595
      %v637 = vunpack.c.l.b16 %v596
      %v638 = vpack.c.b16 %v623, %v622
      %v639 = vpack.c.b16 %v625, %v624
      %v640 = vpack.c.b16 %v627, %v626
      %v641 = vpack.c.b16 %v629, %v628
      %v642 = vpack.c.b16 %v631, %v630
      %v643 = vpack.c.b16 %v633, %v632
      %v644 = vpack.c.b16 %v635, %v634
      %v645 = vpack.c.b16 %v637, %v636
      %654 = vmatprep.subr.bf16.mxu0 0
      %655 = vmatpush1.bf16.msra.mxu0 %v638
      %656 = vmatprep.subr.bf16.mxu0 0
      %657 = vmatpush1.bf16.msra.mxu0 %v639
      %658 = vmatprep.subr.bf16.mxu0 0
      %659 = vmatpush1.bf16.msra.mxu0 %v640
      %660 = vmatprep.subr.bf16.mxu0 0
      %661 = vmatpush1.bf16.msra.mxu0 %v641
      %662 = vmatprep.subr.bf16.mxu0 0
      %663 = vmatpush1.bf16.msra.mxu0 %v642
      %664 = vmatprep.subr.bf16.mxu0 0
      %665 = vmatpush1.bf16.msra.mxu0 %v643
      %666 = vmatprep.subr.bf16.mxu0 0
      %667 = vmatpush1.bf16.msra.mxu0 %v644
      %668 = vmatprep.subr.bf16.mxu0 0
      %669 = vmatpush1.bf16.msra.mxu0 %v645
      %670 = vmatprep.subr.bf16.mxu0 0
      %671 = vmatpush1.bf16.msra.mxu0 0
      %672 = vmatprep.subr.bf16.mxu0 0
      %673 = vmatpush1.bf16.msra.mxu0 0
      %674 = vmatprep.subr.bf16.mxu0 0
      %675 = vmatpush1.bf16.msra.mxu0 0
      %676 = vmatprep.subr.bf16.mxu0 0
      %677 = vmatpush1.bf16.msra.mxu0 0
      %678 = vmatprep.subr.bf16.mxu0 0
      %679 = vmatpush1.bf16.msra.mxu0 0
      %680 = vmatprep.subr.bf16.mxu0 0
      %681 = vmatpush1.bf16.msra.mxu0 0
      %682 = vmatprep.subr.bf16.mxu0 0
      %683 = vmatpush1.bf16.msra.mxu0 0
      %684 = vmatprep.subr.bf16.mxu0 0
      %685 = vmatpush1.bf16.msra.mxu0 0
      %686 = vmatprep.mubr.bf16.mxu0 0
      %687 = vmatmul.mubr.bf16.gmra.mrb[0].mxu0 %v603
      %v688 = vpop.f32.mrb[0].mxu0
      %v689 = vadd.f32 0.0, %v688
      %v690 = vpop.f32.mrb[0].mxu0
      %v691 = vpop.f32.mrb[0].mxu0
      %v692 = vadd.f32 0.0, %v691
      %v693 = vpop.f32.mrb[0].mxu0
      %694 = vmatprep.mubr.bf16.mxu0 0
      %695 = vmatmul.mubr.bf16.gmra.mrb[0].mxu0 %v602
      %v696 = vpop.f32.mrb[0].mxu0
      %v697 = vadd.f32 0.0, %v696
      %v698 = vpop.f32.mrb[0].mxu0
      %v699 = vpop.f32.mrb[0].mxu0
      %v700 = vpop.f32.mrb[0].mxu0
      %701 = vdwg.mxu0
      %v702 = vadd.f32 %v566, %v689
      %v703 = vadd.f32 %v569, %v692
      %v704 = vadd.f32 %v574, %v697
      %v705 = vld [vmem:[%s1] sm:$0x1]
      %v707 = vlaneseq
      %v708 = vshrl.u32 %v707, 7
      %v709 = vsub.s32 0, %v708
      %v710 = vrot.slane %v705, %v709
      %v712 = vmul.f32 %v702, %v710
      %v713 = vmul.f32 %v703, %v710
      %v714 = vmul.f32 %v704, %v710
      %v715 = vld [vmem:[%s2] sm:$0x1]
      %v717 = vlaneseq
      %v718 = vshrl.u32 %v717, 7
      %v719 = vsub.s32 0, %v718
      %v720 = vrot.slane %v715, %v719
      %v722 = vadd.f32 %v712, %v720
      %v723 = vadd.f32 %v713, %v720
      %v724 = vadd.f32 %v714, %v720
      %vm725 = vcmp.gt.f32.partialorder %v722, 0.0
      %vm726 = vcmp.gt.f32.partialorder %v723, 0.0
      %vm727 = vcmp.gt.f32.partialorder %v724, 0.0
      %v728 = vmul.f32 %v722, 0.3
      %v729 = vmul.f32 %v723, 0.3
      %v730 = vmul.f32 %v724, 0.3
      %v731 = vsel %vm725, %v722, %v728
      %v732 = vsel %vm726, %v723, %v729
      %v733 = vsel %vm727, %v724, %v730
      %vm734 = vcmask 1040384
      %vm735 = vsmask.f32 256
      %vm736 = vmand %vm734, %vm735
      %v737 = vld [vmem:[#allocation3] sm:$0x1]
      %v738 = vsel %vm736, 0, %v737
      %739 = vst [vmem:[#allocation3] sm:$0x1] %v738
      %vm740 = vsmask.f32 7938
      %vm741 = vmand %vm734, %vm740
      %v742 = vld [vmem:[#allocation3 + $0xc] sm:$0x1]
      %v743 = vsel %vm741, 0, %v742
      %744 = vst [vmem:[#allocation3 + $0xc] sm:$0x1] %v743
      %v745 = vpack.c.bf16 %v732, %v731
      %v746 = vpack.c.bf16 %v733, %v733
      %v749 = vunpack.c.l.b16 %v745
      %v750 = vunpack.c.h.b16 %v745
      %v751 = vunpack.c.l.b16 %v746
      %v752 = vpack.c.b16 %v749, %v749
      %v753 = vpack.c.b16 %v750, %v750
      %v754 = vpack.c.b16 %v751, %v751
      %vm755 = vsmask.f32 4368
      %vm756 = vmor %vm735, %vm755
      %v758 = vshrl.u32 %v752, 16
      %v760 = vrot.slane %v758, 7
      %v761 = vshll.u32 %v752, 16
      %v763 = vor.u32 %v760, %v761
      %v764 = vrot.slane %v760, 4
      %v766 = vshrl.u32 %v753, 16
      %v768 = vrot.slane %v766, 7
      %v769 = vshll.u32 %v753, 16
      %v771 = vor.u32 %v768, %v769
      %v772 = vsel %vm756, %v764, %v771
      %v773 = vrot.slane %v768, 4
      %v775 = vshrl.u32 %v754, 16
      %v777 = vrot.slane %v775, 7
      %v778 = vshll.u32 %v754, 16
      %v780 = vor.u32 %v777, %v778
      %v781 = vsel %vm756, %v773, %v780
      %v782 = vrot.slane %v777, 4
      %vm787 = vcmask 1043456
      %vm788 = vmand %vm787, %vm740
      %v789 = vld [vmem:[#allocation3] sm:$0xf]
      %v790 = vsel %vm788, %v763, %v789
      %791 = vst [vmem:[#allocation3] sm:$0xf] %v790
      %792 = vst [vmem:[#allocation3 + $0x4] sm:$0xf] %v772
      %793 = vst [vmem:[#allocation3 + $0x8] sm:$0xf] %v781
      %v794 = vld [vmem:[#allocation3 + $0xc] sm:$0x1]
      %v795 = vsel %vm736, %v782, %v794
      %796 = vst [vmem:[#allocation3 + $0xc] sm:$0x1] %v795
      %v797 = vld [vmem:[#allocation3] sm:$0xf]
      %v798 = vld [vmem:[#allocation3 + $0x4] sm:$0xf]
      %v799 = vld [vmem:[#allocation3 + $0x8] sm:$0xf]
      %v800 = vld [vmem:[%s4] sm:$0xf]
      %v801 = vld [vmem:[%s4 + $0x4] sm:$0xf]
      %v802 = vld [vmem:[%s4 + $0x8] sm:$0xf]
      %v803 = vld [vmem:[%s4 + $0xc] sm:$0xf]
      %v804 = vld [vmem:[%s4 + $0x10] sm:$0xf]
      %v805 = vld [vmem:[%s4 + $0x14] sm:$0xf]
      %v806 = vld [vmem:[%s4 + $0x18] sm:$0xf]
      %v807 = vld [vmem:[%s4 + $0x1c] sm:$0xf]
      %v808 = vld [vmem:[%s4 + $0x20] sm:$0xf]
      %v809 = vld [vmem:[%s4 + $0x24] sm:$0xf]
      %v810 = vld [vmem:[%s4 + $0x28] sm:$0xf]
      %v811 = vld [vmem:[%s4 + $0x2c] sm:$0xf]
      %v812 = vld [vmem:[%s4 + $0x30] sm:$0xf]
      %v813 = vld [vmem:[%s4 + $0x34] sm:$0xf]
      %v814 = vld [vmem:[%s4 + $0x38] sm:$0xf]
      %v815 = vld [vmem:[%s4 + $0x3c] sm:$0xf]
      %v816 = vld [vmem:[#allocation3 + $0xc] sm:$0x1]
      %s817 = scalar_lea.vmem %s4, 64
      %v818 = vld [vmem:[%s817] sm:$0xf]
      %v819 = vld [vmem:[%s817 + $0x4] sm:$0xf]
      %v820 = vld [vmem:[%s817 + $0x8] sm:$0xf]
      %v821 = vld [vmem:[%s817 + $0xc] sm:$0xf]
      %v822 = vld [vmem:[%s817 + $0x10] sm:$0xf]
      %v823 = vld [vmem:[%s817 + $0x14] sm:$0xf]
      %v824 = vld [vmem:[%s817 + $0x18] sm:$0xf]
      %v825 = vld [vmem:[%s817 + $0x1c] sm:$0xf]
      %v826 = vld [vmem:[%s817 + $0x20] sm:$0xf]
      %v827 = vld [vmem:[%s817 + $0x24] sm:$0xf]
      %v828 = vld [vmem:[%s817 + $0x28] sm:$0xf]
      %v829 = vld [vmem:[%s817 + $0x2c] sm:$0xf]
      %v830 = vld [vmem:[%s817 + $0x30] sm:$0xf]
      %v831 = vld [vmem:[%s817 + $0x34] sm:$0xf]
      %v832 = vld [vmem:[%s817 + $0x38] sm:$0xf]
      %v833 = vld [vmem:[%s817 + $0x3c] sm:$0xf]
      %v838 = vunpack.c.l.b16 %v797
      %v839 = vunpack.c.l.b16 %v798
      %v840 = vunpack.c.l.b16 %v799
      %v841 = vunpack.c.l.b16 %v816
      %v842 = vpack.c.b16 %v839, %v838
      %v843 = vpack.c.b16 %v841, %v840
      %v845 = vshrl.u32 %v842, 16
      %v847 = vshll.u32 %v842, 16
      %v849 = vrot.slane %v847, 1
      %v850 = vor.u32 %v845, %v849
      %v852 = vshll.u32 %v843, 16
      %v854 = vrot.slane %v852, 1
      %v855 = vsel %vm366, %v850, %v854
      %v856 = vshrl.u32 %v843, 16
      %v858 = vor.u32 %v856, %v854
      %v877 = vunpack.c.l.b16 %v818
      %v878 = vunpack.c.l.b16 %v819
      %v879 = vunpack.c.l.b16 %v820
      %v880 = vunpack.c.l.b16 %v821
      %v881 = vunpack.c.l.b16 %v822
      %v882 = vunpack.c.l.b16 %v823
      %v883 = vunpack.c.l.b16 %v824
      %v884 = vunpack.c.l.b16 %v825
      %v885 = vunpack.c.l.b16 %v826
      %v886 = vunpack.c.l.b16 %v827
      %v887 = vunpack.c.l.b16 %v828
      %v888 = vunpack.c.l.b16 %v829
      %v889 = vunpack.c.l.b16 %v830
      %v890 = vunpack.c.l.b16 %v831
      %v891 = vunpack.c.l.b16 %v832
      %v892 = vunpack.c.l.b16 %v833
      %v893 = vpack.c.b16 %v878, %v877
      %v894 = vpack.c.b16 %v880, %v879
      %v895 = vpack.c.b16 %v882, %v881
      %v896 = vpack.c.b16 %v884, %v883
      %v897 = vpack.c.b16 %v886, %v885
      %v898 = vpack.c.b16 %v888, %v887
      %v899 = vpack.c.b16 %v890, %v889
      %v900 = vpack.c.b16 %v892, %v891
      %909 = vmatprep.subr.bf16.mxu0 0
      %910 = vmatpush1.bf16.msra.mxu0 %v893
      %911 = vmatprep.subr.bf16.mxu0 0
      %912 = vmatpush1.bf16.msra.mxu0 %v894
      %913 = vmatprep.subr.bf16.mxu0 0
      %914 = vmatpush1.bf16.msra.mxu0 %v895
      %915 = vmatprep.subr.bf16.mxu0 0
      %916 = vmatpush1.bf16.msra.mxu0 %v896
      %917 = vmatprep.subr.bf16.mxu0 0
      %918 = vmatpush1.bf16.msra.mxu0 %v897
      %919 = vmatprep.subr.bf16.mxu0 0
      %920 = vmatpush1.bf16.msra.mxu0 %v898
      %921 = vmatprep.subr.bf16.mxu0 0
      %922 = vmatpush1.bf16.msra.mxu0 %v899
      %923 = vmatprep.subr.bf16.mxu0 0
      %924 = vmatpush1.bf16.msra.mxu0 %v900
      %925 = vmatprep.subr.bf16.mxu0 0
      %926 = vmatpush1.bf16.msra.mxu0 0
      %927 = vmatprep.subr.bf16.mxu0 0
      %928 = vmatpush1.bf16.msra.mxu0 0
      %929 = vmatprep.subr.bf16.mxu0 0
      %930 = vmatpush1.bf16.msra.mxu0 0
      %931 = vmatprep.subr.bf16.mxu0 0
      %932 = vmatpush1.bf16.msra.mxu0 0
      %933 = vmatprep.subr.bf16.mxu0 0
      %934 = vmatpush1.bf16.msra.mxu0 0
      %935 = vmatprep.subr.bf16.mxu0 0
      %936 = vmatpush1.bf16.msra.mxu0 0
      %937 = vmatprep.subr.bf16.mxu0 0
      %938 = vmatpush1.bf16.msra.mxu0 0
      %939 = vmatprep.subr.bf16.mxu0 0
      %940 = vmatpush1.bf16.msra.mxu0 0
      %941 = vmatprep.mubr.bf16.mxu0 0
      %942 = vmatmul.mubr.bf16.gmra.mrb[0].mxu0 %v855
      %v943 = vpop.f32.mrb[0].mxu0
      %v944 = vadd.f32 0.0, %v943
      %v945 = vpop.f32.mrb[0].mxu0
      %v946 = vpop.f32.mrb[0].mxu0
      %v947 = vadd.f32 0.0, %v946
      %v948 = vpop.f32.mrb[0].mxu0
      %949 = vmatprep.mubr.bf16.mxu0 0
      %950 = vmatmul.mubr.bf16.gmra.mrb[0].mxu0 %v858
      %v951 = vpop.f32.mrb[0].mxu0
      %v952 = vadd.f32 0.0, %v951
      %v953 = vpop.f32.mrb[0].mxu0
      %v954 = vpop.f32.mrb[0].mxu0
      %v955 = vpop.f32.mrb[0].mxu0
      %956 = vdwg.mxu0
      %v957 = vpack.c.b16 %v840, %v840
      %v976 = vunpack.c.l.b16 %v800
      %v977 = vunpack.c.l.b16 %v801
      %v978 = vunpack.c.l.b16 %v802
      %v979 = vunpack.c.l.b16 %v803
      %v980 = vunpack.c.l.b16 %v804
      %v981 = vunpack.c.l.b16 %v805
      %v982 = vunpack.c.l.b16 %v806
      %v983 = vunpack.c.l.b16 %v807
      %v984 = vunpack.c.l.b16 %v808
      %v985 = vunpack.c.l.b16 %v809
      %v986 = vunpack.c.l.b16 %v810
      %v987 = vunpack.c.l.b16 %v811
      %v988 = vunpack.c.l.b16 %v812
      %v989 = vunpack.c.l.b16 %v813
      %v990 = vunpack.c.l.b16 %v814
      %v991 = vunpack.c.l.b16 %v815
      %v992 = vpack.c.b16 %v977, %v976
      %v993 = vpack.c.b16 %v979, %v978
      %v994 = vpack.c.b16 %v981, %v980
      %v995 = vpack.c.b16 %v983, %v982
      %v996 = vpack.c.b16 %v985, %v984
      %v997 = vpack.c.b16 %v987, %v986
      %v998 = vpack.c.b16 %v989, %v988
      %v999 = vpack.c.b16 %v991, %v990
      %1008 = vmatprep.subr.bf16.mxu0 0
      %1009 = vmatpush1.bf16.msra.mxu0 %v992
      %1010 = vmatprep.subr.bf16.mxu0 0
      %1011 = vmatpush1.bf16.msra.mxu0 %v993
      %1012 = vmatprep.subr.bf16.mxu0 0
      %1013 = vmatpush1.bf16.msra.mxu0 %v994
      %1014 = vmatprep.subr.bf16.mxu0 0
      %1015 = vmatpush1.bf16.msra.mxu0 %v995
      %1016 = vmatprep.subr.bf16.mxu0 0
      %1017 = vmatpush1.bf16.msra.mxu0 %v996
      %1018 = vmatprep.subr.bf16.mxu0 0
      %1019 = vmatpush1.bf16.msra.mxu0 %v997
      %1020 = vmatprep.subr.bf16.mxu0 0
      %1021 = vmatpush1.bf16.msra.mxu0 %v998
      %1022 = vmatprep.subr.bf16.mxu0 0
      %1023 = vmatpush1.bf16.msra.mxu0 %v999
      %1024 = vmatprep.subr.bf16.mxu0 0
      %1025 = vmatpush1.bf16.msra.mxu0 0
      %1026 = vmatprep.subr.bf16.mxu0 0
      %1027 = vmatpush1.bf16.msra.mxu0 0
      %1028 = vmatprep.subr.bf16.mxu0 0
      %1029 = vmatpush1.bf16.msra.mxu0 0
      %1030 = vmatprep.subr.bf16.mxu0 0
      %1031 = vmatpush1.bf16.msra.mxu0 0
      %1032 = vmatprep.subr.bf16.mxu0 0
      %1033 = vmatpush1.bf16.msra.mxu0 0
      %1034 = vmatprep.subr.bf16.mxu0 0
      %1035 = vmatpush1.bf16.msra.mxu0 0
      %1036 = vmatprep.subr.bf16.mxu0 0
      %1037 = vmatpush1.bf16.msra.mxu0 0
      %1038 = vmatprep.subr.bf16.mxu0 0
      %1039 = vmatpush1.bf16.msra.mxu0 0
      %1040 = vmatprep.mubr.bf16.mxu0 0
      %1041 = vmatmul.mubr.bf16.gmra.mrb[0].mxu0 %v842
      %v1042 = vpop.f32.mrb[0].mxu0
      %v1043 = vadd.f32 %v944, %v1042
      %v1044 = vpop.f32.mrb[0].mxu0
      %v1045 = vpop.f32.mrb[0].mxu0
      %v1046 = vadd.f32 %v947, %v1045
      %v1047 = vpop.f32.mrb[0].mxu0
      %1048 = vmatprep.mubr.bf16.mxu0 0
      %1049 = vmatmul.mubr.bf16.gmra.mrb[0].mxu0 %v957
      %v1050 = vpop.f32.mrb[0].mxu0
      %v1051 = vadd.f32 %v952, %v1050
      %v1052 = vpop.f32.mrb[0].mxu0
      %v1053 = vpop.f32.mrb[0].mxu0
      %v1054 = vpop.f32.mrb[0].mxu0
      %1055 = vdwg.mxu0
      %v1056 = vld [vmem:[#allocation3] sm:$0xe]
      %s1057 = scalar_lea.vmem %s4, 128
      %v1058 = vld [vmem:[%s1057] sm:$0xf]
      %v1059 = vld [vmem:[%s1057 + $0x4] sm:$0xf]
      %v1060 = vld [vmem:[%s1057 + $0x8] sm:$0xf]
      %v1061 = vld [vmem:[%s1057 + $0xc] sm:$0xf]
      %v1062 = vld [vmem:[%s1057 + $0x10] sm:$0xf]
      %v1063 = vld [vmem:[%s1057 + $0x14] sm:$0xf]
      %v1064 = vld [vmem:[%s1057 + $0x18] sm:$0xf]
      %v1065 = vld [vmem:[%s1057 + $0x1c] sm:$0xf]
      %v1066 = vld [vmem:[%s1057 + $0x20] sm:$0xf]
      %v1067 = vld [vmem:[%s1057 + $0x24] sm:$0xf]
      %v1068 = vld [vmem:[%s1057 + $0x28] sm:$0xf]
      %v1069 = vld [vmem:[%s1057 + $0x2c] sm:$0xf]
      %v1070 = vld [vmem:[%s1057 + $0x30] sm:$0xf]
      %v1071 = vld [vmem:[%s1057 + $0x34] sm:$0xf]
      %v1072 = vld [vmem:[%s1057 + $0x38] sm:$0xf]
      %v1073 = vld [vmem:[%s1057 + $0x3c] sm:$0xf]
      %v1075 = vunpack.c.l.b16 %v1056
      %v1076 = vpack.c.b16 %v839, %v1075
      %v1077 = vrot.slane %v1076, 1
      %v1078 = vrot.slane %v843, 1
      %v1079 = vsel %vm600, %v1077, %v1078
      %v1098 = vunpack.c.l.b16 %v1058
      %v1099 = vunpack.c.l.b16 %v1059
      %v1100 = vunpack.c.l.b16 %v1060
      %v1101 = vunpack.c.l.b16 %v1061
      %v1102 = vunpack.c.l.b16 %v1062
      %v1103 = vunpack.c.l.b16 %v1063
      %v1104 = vunpack.c.l.b16 %v1064
      %v1105 = vunpack.c.l.b16 %v1065
      %v1106 = vunpack.c.l.b16 %v1066
      %v1107 = vunpack.c.l.b16 %v1067
      %v1108 = vunpack.c.l.b16 %v1068
      %v1109 = vunpack.c.l.b16 %v1069
      %v1110 = vunpack.c.l.b16 %v1070
      %v1111 = vunpack.c.l.b16 %v1071
      %v1112 = vunpack.c.l.b16 %v1072
      %v1113 = vunpack.c.l.b16 %v1073
      %v1114 = vpack.c.b16 %v1099, %v1098
      %v1115 = vpack.c.b16 %v1101, %v1100
      %v1116 = vpack.c.b16 %v1103, %v1102
      %v1117 = vpack.c.b16 %v1105, %v1104
      %v1118 = vpack.c.b16 %v1107, %v1106
      %v1119 = vpack.c.b16 %v1109, %v1108
      %v1120 = vpack.c.b16 %v1111, %v1110
      %v1121 = vpack.c.b16 %v1113, %v1112
      %1130 = vmatprep.subr.bf16.mxu0 0
      %1131 = vmatpush1.bf16.msra.mxu0 %v1114
      %1132 = vmatprep.subr.bf16.mxu0 0
      %1133 = vmatpush1.bf16.msra.mxu0 %v1115
      %1134 = vmatprep.subr.bf16.mxu0 0
      %1135 = vmatpush1.bf16.msra.mxu0 %v1116
      %1136 = vmatprep.subr.bf16.mxu0 0
      %1137 = vmatpush1.bf16.msra.mxu0 %v1117
      %1138 = vmatprep.subr.bf16.mxu0 0
      %1139 = vmatpush1.bf16.msra.mxu0 %v1118
      %1140 = vmatprep.subr.bf16.mxu0 0
      %1141 = vmatpush1.bf16.msra.mxu0 %v1119
      %1142 = vmatprep.subr.bf16.mxu0 0
      %1143 = vmatpush1.bf16.msra.mxu0 %v1120
      %1144 = vmatprep.subr.bf16.mxu0 0
      %1145 = vmatpush1.bf16.msra.mxu0 %v1121
      %1146 = vmatprep.subr.bf16.mxu0 0
      %1147 = vmatpush1.bf16.msra.mxu0 0
      %1148 = vmatprep.subr.bf16.mxu0 0
      %1149 = vmatpush1.bf16.msra.mxu0 0
      %1150 = vmatprep.subr.bf16.mxu0 0
      %1151 = vmatpush1.bf16.msra.mxu0 0
      %1152 = vmatprep.subr.bf16.mxu0 0
      %1153 = vmatpush1.bf16.msra.mxu0 0
      %1154 = vmatprep.subr.bf16.mxu0 0
      %1155 = vmatpush1.bf16.msra.mxu0 0
      %1156 = vmatprep.subr.bf16.mxu0 0
      %1157 = vmatpush1.bf16.msra.mxu0 0
      %1158 = vmatprep.subr.bf16.mxu0 0
      %1159 = vmatpush1.bf16.msra.mxu0 0
      %1160 = vmatprep.subr.bf16.mxu0 0
      %1161 = vmatpush1.bf16.msra.mxu0 0
      %1162 = vmatprep.mubr.bf16.mxu0 0
      %1163 = vmatmul.mubr.bf16.gmra.mrb[0].mxu0 %v1079
      %v1164 = vpop.f32.mrb[0].mxu0
      %v1165 = vadd.f32 0.0, %v1164
      %v1166 = vpop.f32.mrb[0].mxu0
      %v1167 = vpop.f32.mrb[0].mxu0
      %v1168 = vadd.f32 0.0, %v1167
      %v1169 = vpop.f32.mrb[0].mxu0
      %1170 = vmatprep.mubr.bf16.mxu0 0
      %1171 = vmatmul.mubr.bf16.gmra.mrb[0].mxu0 %v1078
      %v1172 = vpop.f32.mrb[0].mxu0
      %v1173 = vadd.f32 0.0, %v1172
      %v1174 = vpop.f32.mrb[0].mxu0
      %v1175 = vpop.f32.mrb[0].mxu0
      %v1176 = vpop.f32.mrb[0].mxu0
      %1177 = vdwg.mxu0
      %v1178 = vadd.f32 %v1043, %v1165
      %v1179 = vadd.f32 %v1046, %v1168
      %v1180 = vadd.f32 %v1051, %v1173
      %v1181 = vld [vmem:[%s5] sm:$0x1]
      %v1183 = vlaneseq
      %v1184 = vshrl.u32 %v1183, 7
      %v1185 = vsub.s32 0, %v1184
      %v1186 = vrot.slane %v1181, %v1185
      %v1188 = vadd.f32 %v1178, %v1186
      %v1189 = vadd.f32 %v1179, %v1186
      %v1190 = vadd.f32 %v1180, %v1186
      %v1191 = vld [vmem:[#allocation2] sm:$0xf]
      %v1192 = vld [vmem:[#allocation2 + $0x4] sm:$0xf]
      %v1193 = vld [vmem:[#allocation2 + $0x8] sm:$0xf]
      %v1194 = vld [vmem:[#allocation2 + $0xc] sm:$0x1]
      %v1195 = vld [vmem:[%s6] sm:$0xf]
      %v1196 = vld [vmem:[%s6 + $0x4] sm:$0xf]
      %v1197 = vld [vmem:[%s6 + $0x8] sm:$0xf]
      %v1198 = vld [vmem:[%s6 + $0xc] sm:$0xf]
      %v1199 = vld [vmem:[%s6 + $0x10] sm:$0xf]
      %v1200 = vld [vmem:[%s6 + $0x14] sm:$0xf]
      %v1201 = vld [vmem:[%s6 + $0x18] sm:$0xf]
      %v1202 = vld [vmem:[%s6 + $0x1c] sm:$0xf]
      %v1203 = vld [vmem:[%s6 + $0x20] sm:$0xf]
      %v1204 = vld [vmem:[%s6 + $0x24] sm:$0xf]
      %v1205 = vld [vmem:[%s6 + $0x28] sm:$0xf]
      %v1206 = vld [vmem:[%s6 + $0x2c] sm:$0xf]
      %v1207 = vld [vmem:[%s6 + $0x30] sm:$0xf]
      %v1208 = vld [vmem:[%s6 + $0x34] sm:$0xf]
      %v1209 = vld [vmem:[%s6 + $0x38] sm:$0xf]
      %v1210 = vld [vmem:[%s6 + $0x3c] sm:$0xf]
      %v1215 = vunpack.c.l.b16 %v1191
      %v1216 = vunpack.c.l.b16 %v1192
      %v1217 = vunpack.c.l.b16 %v1193
      %v1218 = vunpack.c.l.b16 %v1194
      %v1219 = vpack.c.b16 %v1216, %v1215
      %v1220 = vpack.c.b16 %v1218, %v1217
      %v1222 = vshrl.u32 %v1219, 16
      %v1224 = vshll.u32 %v1219, 16
      %v1226 = vrot.slane %v1224, 1
      %v1227 = vor.u32 %v1222, %v1226
      %v1229 = vshll.u32 %v1220, 16
      %v1231 = vrot.slane %v1229, 1
      %v1232 = vsel %vm366, %v1227, %v1231
      %v1233 = vshrl.u32 %v1220, 16
      %v1235 = vor.u32 %v1233, %v1231
      %v1254 = vunpack.c.l.b16 %v1195
      %v1255 = vunpack.c.l.b16 %v1196
      %v1256 = vunpack.c.l.b16 %v1197
      %v1257 = vunpack.c.l.b16 %v1198
      %v1258 = vunpack.c.l.b16 %v1199
      %v1259 = vunpack.c.l.b16 %v1200
      %v1260 = vunpack.c.l.b16 %v1201
      %v1261 = vunpack.c.l.b16 %v1202
      %v1262 = vunpack.c.l.b16 %v1203
      %v1263 = vunpack.c.l.b16 %v1204
      %v1264 = vunpack.c.l.b16 %v1205
      %v1265 = vunpack.c.l.b16 %v1206
      %v1266 = vunpack.c.l.b16 %v1207
      %v1267 = vunpack.c.l.b16 %v1208
      %v1268 = vunpack.c.l.b16 %v1209
      %v1269 = vunpack.c.l.b16 %v1210
      %v1270 = vpack.c.b16 %v1255, %v1254
      %v1271 = vpack.c.b16 %v1257, %v1256
      %v1272 = vpack.c.b16 %v1259, %v1258
      %v1273 = vpack.c.b16 %v1261, %v1260
      %v1274 = vpack.c.b16 %v1263, %v1262
      %v1275 = vpack.c.b16 %v1265, %v1264
      %v1276 = vpack.c.b16 %v1267, %v1266
      %v1277 = vpack.c.b16 %v1269, %v1268
      %1286 = vmatprep.subr.bf16.mxu0 0
      %1287 = vmatpush1.bf16.msra.mxu0 %v1270
      %1288 = vmatprep.subr.bf16.mxu0 0
      %1289 = vmatpush1.bf16.msra.mxu0 %v1271
      %1290 = vmatprep.subr.bf16.mxu0 0
      %1291 = vmatpush1.bf16.msra.mxu0 %v1272
      %1292 = vmatprep.subr.bf16.mxu0 0
      %1293 = vmatpush1.bf16.msra.mxu0 %v1273
      %1294 = vmatprep.subr.bf16.mxu0 0
      %1295 = vmatpush1.bf16.msra.mxu0 %v1274
      %1296 = vmatprep.subr.bf16.mxu0 0
      %1297 = vmatpush1.bf16.msra.mxu0 %v1275
      %1298 = vmatprep.subr.bf16.mxu0 0
      %1299 = vmatpush1.bf16.msra.mxu0 %v1276
      %1300 = vmatprep.subr.bf16.mxu0 0
      %1301 = vmatpush1.bf16.msra.mxu0 %v1277
      %1302 = vmatprep.subr.bf16.mxu0 0
      %1303 = vmatpush1.bf16.msra.mxu0 0
      %1304 = vmatprep.subr.bf16.mxu0 0
      %1305 = vmatpush1.bf16.msra.mxu0 0
      %1306 = vmatprep.subr.bf16.mxu0 0
      %1307 = vmatpush1.bf16.msra.mxu0 0
      %1308 = vmatprep.subr.bf16.mxu0 0
      %1309 = vmatpush1.bf16.msra.mxu0 0
      %1310 = vmatprep.subr.bf16.mxu0 0
      %1311 = vmatpush1.bf16.msra.mxu0 0
      %1312 = vmatprep.subr.bf16.mxu0 0
      %1313 = vmatpush1.bf16.msra.mxu0 0
      %1314 = vmatprep.subr.bf16.mxu0 0
      %1315 = vmatpush1.bf16.msra.mxu0 0
      %1316 = vmatprep.subr.bf16.mxu0 0
      %1317 = vmatpush1.bf16.msra.mxu0 0
      %1318 = vmatprep.mubr.bf16.mxu0 0
      %1319 = vmatmul.mubr.bf16.gmra.mrb[0].mxu0 %v1232
      %v1320 = vpop.f32.mrb[0].mxu0
      %v1321 = vadd.f32 0.0, %v1320
      %v1322 = vpop.f32.mrb[0].mxu0
      %v1323 = vpop.f32.mrb[0].mxu0
      %v1324 = vadd.f32 0.0, %v1323
      %v1325 = vpop.f32.mrb[0].mxu0
      %1326 = vmatprep.mubr.bf16.mxu0 0
      %1327 = vmatmul.mubr.bf16.gmra.mrb[0].mxu0 %v1235
      %v1328 = vpop.f32.mrb[0].mxu0
      %v1329 = vadd.f32 0.0, %v1328
      %v1330 = vpop.f32.mrb[0].mxu0
      %v1331 = vpop.f32.mrb[0].mxu0
      %v1332 = vpop.f32.mrb[0].mxu0
      %1333 = vdwg.mxu0
      %v1334 = vadd.f32 %v1188, %v1321
      %v1335 = vadd.f32 %v1189, %v1324
      %v1336 = vadd.f32 %v1190, %v1329
      %v1337 = vld [vmem:[%s7] sm:$0x1]
      %v1339 = vlaneseq
      %v1340 = vshrl.u32 %v1339, 7
      %v1341 = vsub.s32 0, %v1340
      %v1342 = vrot.slane %v1337, %v1341
      %v1344 = vadd.f32 %v1334, %v1342
      %v1345 = vadd.f32 %v1335, %v1342
      %v1346 = vadd.f32 %v1336, %v1342
      %vm1350 = vcmask 1046528
      %v1351 = vrot.slane %v1344, 1
      %v1352 = vrot.slane %v1345, 1
      %v1353 = vsel %vm1350, %v1351, %v1352
      %v1354 = vrot.slane %v1346, 1
      %v1355 = vsel %vm1350, %v1352, %v1354
      %v1359 = vmax.f32 %v1344, %v1353
      %v1360 = vmax.f32 %v1345, %v1355
      %v1361 = vmax.f32 %v1346, %v1354
      %vm1362 = vcmask 1045504
      %v1363 = vrot.slane %v1344, 2
      %v1364 = vrot.slane %v1345, 2
      %v1365 = vsel %vm1362, %v1363, %v1364
      %v1366 = vrot.slane %v1346, 2
      %v1367 = vsel %vm1362, %v1364, %v1366
      %v1371 = vmax.f32 %v1359, %v1365
      %v1372 = vmax.f32 %v1360, %v1367
      %v1373 = vmax.f32 %v1361, %v1366
      %1374 = vst [vmem:[#allocation4] sm:$0xff] %v1371
      %1375 = vst [vmem:[#allocation4 + $0x8] sm:$0xff] %v1372
      %1376 = vst [vmem:[#allocation4 + $0x10] sm:$0x3f] %v1373
      %v1377 = vld [vmem:[#allocation4] ss:$3 sm:$0xff]
      %1378 = vst [vmem:[%s303] sm:$0xff] %v1377
      %p1379 = scmp.lt.s32.totalorder %s19, 1
      %s1380 = scalar_select %p1379, %s19, 1
      %s1381 = smul.addr %s1380, 8
      %s1382 = scalar_lea.vmem %s8, %s1381
      // Predicated region
      $region53: #{residual_block_pallas.3} parent=51 // pred_check
        %p1383 = pneg %p210
      $region54: #{residual_block_pallas.3} parent=51 // pred_check_branch
        %1385 = sbr.rel (%p1383) target = $region56
      $region55: #{residual_block_pallas.3} parent=51 // pred_region
        _
      $region56: #{residual_block_pallas.3} parent=51 // pred_fallthru
        _
    $region52: #{residual_block_pallas.3} parent=5 // pred_fallthru
      _
    %p1386 = scmp.le.s32.totalorder 2, %s14
    // Predicated region
    $region57: #{residual_block_pallas.3} parent=5 // pred_check
      %p1387 = pneg %p1386
    $region58: #{residual_block_pallas.3} parent=5 // pred_check_branch
      %1389 = sbr.rel (%p1387) target = $region60
    $region59: #{residual_block_pallas.3} parent=5 // pred_region
      %s1390 = ssub.s32 %s14, 2
      // Predicated region
      $region61: #{residual_block_pallas.3} parent=59 // pred_check
        %p1391 = pneg %p216
      $region62: #{residual_block_pallas.3} parent=59 // pred_check_branch
        %1393 = sbr.rel (%p1391) target = $region64
      $region63: #{residual_block_pallas.3} parent=59 // pred_region
        %p1394 = scmp.lt.s32.totalorder %s20, 1
        %s1395 = scalar_select %p1394, %s20, 1
        %s1396 = smul.addr %s1395, 8
        %s1397 = scalar_lea.vmem %s8, %s1396
      $region64: #{residual_block_pallas.3} parent=59 // pred_fallthru
        _
    $region60: #{residual_block_pallas.3} parent=5 // pred_fallthru
      _
  $region6: #{residual_block_pallas.3} parent=0 // loop_footer
    %s18 = sadd.s32 1, %s14
  $region7: #{residual_block_pallas.3} parent=0 // loop_footer_branch
    %13 = sbr.rel target = $region3
  $region8: #{residual_block_pallas.3} parent=0 // loop_exit
    _

</llo_original>
